<compile_context>
chip_gen: v7x
topology: tpu7x:2x2x1
jax: 0.10.0
libtpu: 0.0.40
codegen_flags: <defaults>
</compile_context>

<pallas_src>
import functools

import jax
import jax.numpy as jnp
import numpy as np
from jax import lax
from jax.experimental import pallas as pl
from jax.experimental.pallas import tpu as pltpu

# Small shapes consistent with LSTMPlusModel.__init__
BATCH = 2
SEQ = 8            # sequence_length
MODEL_DIM = 32     # model_dim
STATE_DIM = 16     # state_dim (per-head LSTM hidden size)
N_HEADS = 2        # n_heads
N_LAYERS = 2       # n_layers
VOCAB = 16         # vocab_size
VPAD = 128         # vocab head padded to a full lane width
EPS = 1e-5         # nn.LayerNorm default eps

HS = N_HEADS * STATE_DIM            # 32 lanes of packed per-head hidden state
assert HS == MODEL_DIM, "slab packing below assumes state_dim*n_heads == model_dim"

# f32 slab row layout: [0, VOCAB) = per-token gx table, then biases.
_ROW_BIAS1 = VOCAB + 0              # layer-1 LSTM bias (b_ih + b_hh), packed gates
_ROW_BLIN0 = VOCAB + 1              # block-0 linear bias (lanes 0:D)
_ROW_BLIN1 = VOCAB + 2              # block-1 linear bias (lanes 0:D)
_ROW_BOUT = VOCAB + 3               # vocab head bias (lanes 0:VOCAB)
_FSLAB_ROWS = VOCAB + 4

# bf16 MXU-weight slab indices (each entry is (32, 128), zero-padded lanes).
_W_WHH0, _W_WIH1, _W_WHH1, _W_WLIN0, _W_WLIN1, _W_WOUT = range(6)


# ----------------------------- Pallas kernel ------------------------------- #

def fused_kernel(tok_ref, fslab_ref, wslab_ref, out_ref, gx_scr, h_scr, *, B, L, D):
    """Whole LSTMPlusModel forward in one kernel.

    tok_ref  : (B, L) int32 in SMEM — raw token ids (gather done in-kernel)
    fslab_ref: (VOCAB+4, 128) f32   — gx lookup table + biases
    wslab_ref: (6, 32, 128) bf16    — whh0 | wih1 | whh1 | wlin0T | wlin1T | woutT
    out_ref  : (B*L, 128) f32       — logits, rows already in (b, t) order
    gx_scr   : (B*L, 128) f32 VMEM  — per-layer input-projection gates (time-major)
    h_scr    : (B*L, HS)  f32 VMEM  — per-step hidden states (time-major)
    """
    G3 = 3 * HS

    def run_lstm(whh):
        # gx for every (t, b) row already lives in gx_scr (row = t*B + b).
        h = jnp.zeros((B, HS), jnp.float32)       # PyTorch LSTM zero init state
        c = jnp.zeros((B, HS), jnp.float32)
        for t in range(L):                        # static unroll (L = 8)
            gates = gx_scr[pl.ds(t * B, B), :] + jnp.dot(
                h.astype(jnp.bfloat16), whh,
                preferred_element_type=jnp.float32)           # (B, 128) f32
            sg = jax.nn.sigmoid(gates[:, :G3])    # [i|f|o] lanes only (96)
            g = jnp.tanh(gates[:, G3:])           # [g] lanes only (32)
            i_ = sg[:, :HS]
            f_ = sg[:, HS:2 * HS]
            o_ = sg[:, 2 * HS:]
            c = f_ * c + i_ * g
            h = o_ * jnp.tanh(c)                  # (B, HS) = [head0 | head1]
            h_scr[pl.ds(t * B, B), :] = h         # off the h->h critical chain

    # ---- Block 0 -----------------------------------------------------------
    # gx = LN(embed(tok)) @ Wih0 + b0 depends only on the token id; gather the
    # host-precomputed per-token rows (fslab rows [0, VOCAB)) into gx_scr.
    for t in range(L):
        for b in range(B):
            tok = tok_ref[b, t]
            gx_scr[pl.ds(t * B + b, 1), :] = fslab_ref[pl.ds(tok, 1), :]
    run_lstm(wslab_ref[_W_WHH0])

    # Deferred block-0 output projection (kept time-major for the next block).
    h_all = h_scr[...].astype(jnp.bfloat16)                       # (L*B, HS)
    x = (jnp.dot(h_all, wslab_ref[_W_WLIN0],
                 preferred_element_type=jnp.float32)[:, :D]
         + fslab_ref[_ROW_BLIN0:_ROW_BLIN0 + 1, :D])              # (L*B, D)
    # TODO(synk): nn.Dropout — identity in eval mode; training dropout not implemented.

    # ---- Block 1 -----------------------------------------------------------
    mean = jnp.mean(x, axis=-1, keepdims=True)                    # LayerNorm (no affine)
    xc = x - mean
    var = jnp.mean(xc * xc, axis=-1, keepdims=True)
    xn = xc * lax.rsqrt(var + EPS)
    gx_scr[...] = (jnp.dot(xn.astype(jnp.bfloat16), wslab_ref[_W_WIH1],
                           preferred_element_type=jnp.float32)
                   + fslab_ref[_ROW_BIAS1:_ROW_BIAS1 + 1, :])
    run_lstm(wslab_ref[_W_WHH1])

    # ---- Epilogue: batch-major reorder + block-1 linear + vocab head -------
    # Strided reads turn time-major rows (t*B + b) into final (b*L + t) order,
    # so the wrapper needs no transpose.
    h_bm = jnp.concatenate(
        [h_scr[pl.ds(b, L, stride=B), :] for b in range(B)], axis=0
    ).astype(jnp.bfloat16)                                        # (B*L, HS)
    x = (jnp.dot(h_bm, wslab_ref[_W_WLIN1],
                 preferred_element_type=jnp.float32)[:, :D]
         + fslab_ref[_ROW_BLIN1:_ROW_BLIN1 + 1, :D])              # (B*L, D)
    out_ref[...] = (jnp.dot(x.astype(jnp.bfloat16), wslab_ref[_W_WOUT],
                            preferred_element_type=jnp.float32)
                    + fslab_ref[_ROW_BOUT:_ROW_BOUT + 1, :])      # lane-dense store


# ------------------------------ Wrapper ------------------------------------ #

_VMEM_SPEC = pl.BlockSpec(memory_space=pltpu.MemorySpace.VMEM)
_SMEM_SPEC = pl.BlockSpec(memory_space=pltpu.MemorySpace.SMEM)


@jax.jit
def forward(tokens, packed):
    """tokens: (B, L) int32 -> logits (B, L, VOCAB)."""
    B, L = tokens.shape
    kernel = functools.partial(fused_kernel, B=B, L=L, D=MODEL_DIM)
    out = pl.pallas_call(
        kernel,
        out_shape=jax.ShapeDtypeStruct((B * L, VPAD), jnp.float32),
        in_specs=[_SMEM_SPEC, _VMEM_SPEC, _VMEM_SPEC],
        out_specs=_VMEM_SPEC,
        scratch_shapes=[
            pltpu.VMEM((B * L, 4 * HS), jnp.float32),   # gx (gate pre-activations)
            pltpu.VMEM((B * L, HS), jnp.float32),       # per-step hidden states
        ],
    )(tokens, packed['fslab'], packed['wslab'])
    return out[:, :VOCAB].reshape(B, L, VOCAB)          # single cheap slice + free reshape


# ------------------------ Host-side weight packing -------------------------- #

def pack_params(params):
    """One-time host packing: gate reorder [i|f|o|g], head packing, transposes,
    bf16 weight slab, layer-0 gx lookup table, lane padding."""
    S, H, D, V = STATE_DIM, N_HEADS, MODEL_DIM, VOCAB
    G = 4 * HS
    DST2SRC = (0, 1, 3, 2)   # kernel gate order [i,f,o,g]  <-  torch order [i,f,g,o]

    def pack_gates(blk):
        wih = np.asarray(blk['wih'], np.float32)                  # (H, 4S, D)
        whh = np.asarray(blk['whh'], np.float32)                  # (H, 4S, S)
        bsum = np.asarray(blk['bih'] + blk['bhh'], np.float32)    # (H, 4S)
        wih_cat = np.zeros((D, G), np.float32)                    # x @ W -> gates
        whh_cat = np.zeros((HS, G), np.float32)                   # h @ W (block-diag)
        b_cat = np.zeros((G,), np.float32)
        for gd, gs in enumerate(DST2SRC):
            for h in range(H):
                col = slice(gd * HS + h * S, gd * HS + (h + 1) * S)
                row = slice(gs * S, (gs + 1) * S)
                wih_cat[:, col] = wih[h, row, :].T
                whh_cat[h * S:(h + 1) * S, col] = whh[h, row, :].T
                b_cat[col] = bsum[h, row]
        return wih_cat, whh_cat, b_cat

    wih0, whh0, b0 = pack_gates(params['blocks'][0])
    wih1, whh1, b1 = pack_gates(params['blocks'][1])

    # Layer-0 shortcut: LN(embedding) @ Wih0 + b0 per token id (exact fold).
    emb = np.asarray(params['embedding'], np.float32)             # (V, D)
    mean = emb.mean(-1, keepdims=True)
    var = ((emb - mean) ** 2).mean(-1, keepdims=True)
    embn = (emb - mean) / np.sqrt(var + EPS)
    gx_table = embn @ wih0 + b0                                   # (V, 128)

    # f32 slab: gx table + biases (everything the VPU adds in f32).
    fslab = np.zeros((_FSLAB_ROWS, VPAD), np.float32)
    fslab[:V] = gx_table
    fslab[_ROW_BIAS1] = b1
    fslab[_ROW_BLIN0, :D] = np.asarray(params['blocks'][0]['blin'], np.float32)
    fslab[_ROW_BLIN1, :D] = np.asarray(params['blocks'][1]['blin'], np.float32)
    fslab[_ROW_BOUT, :V] = np.asarray(params['bout'], np.float32)

    # bf16 slab: every MXU weight, 128-lane padded, statically indexed in-kernel.
    wslab = np.zeros((6, HS, VPAD), np.float32)
    wslab[_W_WHH0] = whh0
    wslab[_W_WIH1] = wih1
    wslab[_W_WHH1] = whh1
    wslab[_W_WLIN0, :, :D] = np.asarray(params['blocks'][0]['wlin'], np.float32).T
    wslab[_W_WLIN1, :, :D] = np.asarray(params['blocks'][1]['wlin'], np.float32).T
    wslab[_W_WOUT, :, :V] = np.asarray(params['wout'], np.float32).T

    return {'fslab': jnp.asarray(fslab),
            'wslab': jnp.asarray(wslab, dtype=jnp.bfloat16)}


# ------------------------- Pure-JAX reference ------------------------------ #

def ref_forward(tokens, params):
    bt, _ = tokens.shape
    x = params['embedding'][tokens]
    for blk in params['blocks']:
        mean = x.mean(-1, keepdims=True)
        var = ((x - mean) ** 2).mean(-1, keepdims=True)
        xn = (x - mean) / jnp.sqrt(var + EPS)
        heads = []
        for h in range(N_HEADS):
            wih, whh = blk['wih'][h], blk['whh'][h]
            bih, bhh = blk['bih'][h], blk['bhh'][h]

            def cell(carry, xt, wih=wih, whh=whh, bih=bih, bhh=bhh):
                hh, cc = carry
                gates = xt @ wih.T + bih + hh @ whh.T + bhh
                i = jax.nn.sigmoid(gates[:, :STATE_DIM])
                f = jax.nn.sigmoid(gates[:, STATE_DIM:2 * STATE_DIM])
                g = jnp.tanh(gates[:, 2 * STATE_DIM:3 * STATE_DIM])
                o = jax.nn.sigmoid(gates[:, 3 * STATE_DIM:])
                cc = f * cc + i * g
                hh = o * jnp.tanh(cc)
                return (hh, cc), hh

            init = (jnp.zeros((bt, STATE_DIM)), jnp.zeros((bt, STATE_DIM)))
            _, hs = lax.scan(cell, init, jnp.transpose(xn, (1, 0, 2)))
            heads.append(jnp.transpose(hs, (1, 0, 2)))
        hcat = jnp.concatenate(heads, axis=-1)
        x = hcat @ blk['wlin'].T + blk['blin']
    return x @ params['wout'].T + params['bout']


# ------------------------------- Params ------------------------------------ #

def init_params(key):
    keys = list(jax.random.split(key, 32))

    def uniform(shape, scale):
        return jax.random.uniform(keys.pop(0), shape, jnp.float32, -scale, scale)

    params = {'embedding': uniform((VOCAB, MODEL_DIM), 1.0)}
    k_lstm = 1.0 / np.sqrt(STATE_DIM)
    k_lin = 1.0 / np.sqrt(STATE_DIM * N_HEADS)
    blocks = []
    for _ in range(N_LAYERS):
        blocks.append({
            'wih': uniform((N_HEADS, 4 * STATE_DIM, MODEL_DIM), k_lstm),
            'whh': uniform((N_HEADS, 4 * STATE_DIM, STATE_DIM), k_lstm),
            'bih': uniform((N_HEADS, 4 * STATE_DIM), k_lstm),
            'bhh': uniform((N_HEADS, 4 * STATE_DIM), k_lstm),
            'wlin': uniform((MODEL_DIM, STATE_DIM * N_HEADS), k_lin),
            'blin': uniform((MODEL_DIM,), k_lin),
        })
    params['blocks'] = blocks
    k_out = 1.0 / np.sqrt(MODEL_DIM)
    params['wout'] = uniform((VOCAB, MODEL_DIM), k_out)
    params['bout'] = uniform((VOCAB,), k_out)
    return params


# -------------------------------- Main -------------------------------------- #

if __name__ == "__main__":
    # TODO(synk): recurrent_step / stateful recurrent_state API not implemented
    #             (full-sequence forward pass only, as in LSTMPlusModel.forward).
    params = init_params(jax.random.PRNGKey(0))
    packed = pack_params(params)                 # one-time host-side packing
    tokens = jax.random.randint(jax.random.PRNGKey(1), (BATCH, SEQ), 0, VOCAB,
                                dtype=jnp.int32)

    out = jax.block_until_ready(forward(tokens, packed))
    assert out.shape == (BATCH, SEQ, VOCAB), out.shape

    ref = jax.block_until_ready(ref_forward(tokens, params))
    np.testing.assert_allclose(np.asarray(out), np.asarray(ref),
                               rtol=2e-2, atol=2e-2)

    print("KERNEL_OK")
</pallas_src>

<mosaic_0001>
module attributes {stable_mosaic.version = 11 : i64} {
  func.func @fused_kernel(%arg0: memref<2x8xi32, #tpu.memory_space<smem>>, %arg1: memref<20x128xf32, #tpu.memory_space<vmem>>, %arg2: memref<6x32x128xbf16, #tpu.memory_space<vmem>>, %arg3: memref<16x128xf32, #tpu.memory_space<vmem>>, %arg4: memref<16x128xf32, #tpu.memory_space<vmem>>, %arg5: memref<16x32xf32, #tpu.memory_space<vmem>>) attributes {dimension_semantics = [], scalar_prefetch = 0 : i64, scratch_operands = 2 : i64, tpu.core_type = #tpu.core_type<tc>} {
    %c0 = arith.constant 0 : index
    %c0_0 = arith.constant 0 : index
    %0 = memref.load %arg0[%c0, %c0_0] : memref<2x8xi32, #tpu.memory_space<smem>>
    %1 = arith.index_cast %0 : i32 to index
    %c0_1 = arith.constant 0 : index
    %2 = vector.load %arg1[%1, %c0_1] : memref<20x128xf32, #tpu.memory_space<vmem>>, vector<1x128xf32>
    %c0_2 = arith.constant 0 : index
    %c0_3 = arith.constant 0 : index
    %3 = vector.load %arg4[%c0_2, %c0_3] : memref<16x128xf32, #tpu.memory_space<vmem>>, vector<1x128xf32>
    tpu.vector_store %arg4[%c0_2, %c0_3], %2 {strides = array<i32>} : memref<16x128xf32, #tpu.memory_space<vmem>>, vector<1x128xf32>,
    %c1 = arith.constant 1 : index
    %c0_4 = arith.constant 0 : index
    %4 = memref.load %arg0[%c1, %c0_4] : memref<2x8xi32, #tpu.memory_space<smem>>
    %5 = arith.index_cast %4 : i32 to index
    %c0_5 = arith.constant 0 : index
    %6 = vector.load %arg1[%5, %c0_5] : memref<20x128xf32, #tpu.memory_space<vmem>>, vector<1x128xf32>
    %c1_6 = arith.constant 1 : index
    %c0_7 = arith.constant 0 : index
    %7 = vector.load %arg4[%c1_6, %c0_7] : memref<16x128xf32, #tpu.memory_space<vmem>>, vector<1x128xf32>
    tpu.vector_store %arg4[%c1_6, %c0_7], %6 {strides = array<i32>} : memref<16x128xf32, #tpu.memory_space<vmem>>, vector<1x128xf32>,
    %c0_8 = arith.constant 0 : index
    %c1_9 = arith.constant 1 : index
    %8 = memref.load %arg0[%c0_8, %c1_9] : memref<2x8xi32, #tpu.memory_space<smem>>
    %9 = arith.index_cast %8 : i32 to index
    %c0_10 = arith.constant 0 : index
    %10 = vector.load %arg1[%9, %c0_10] : memref<20x128xf32, #tpu.memory_space<vmem>>, vector<1x128xf32>
    %c2 = arith.constant 2 : index
    %c0_11 = arith.constant 0 : index
    %11 = vector.load %arg4[%c2, %c0_11] : memref<16x128xf32, #tpu.memory_space<vmem>>, vector<1x128xf32>
    tpu.vector_store %arg4[%c2, %c0_11], %10 {strides = array<i32>} : memref<16x128xf32, #tpu.memory_space<vmem>>, vector<1x128xf32>,
    %c1_12 = arith.constant 1 : index
    %c1_13 = arith.constant 1 : index
    %12 = memref.load %arg0[%c1_12, %c1_13] : memref<2x8xi32, #tpu.memory_space<smem>>
    %13 = arith.index_cast %12 : i32 to index
    %c0_14 = arith.constant 0 : index
    %14 = vector.load %arg1[%13, %c0_14] : memref<20x128xf32, #tpu.memory_space<vmem>>, vector<1x128xf32>
    %c3 = arith.constant 3 : index
    %c0_15 = arith.constant 0 : index
    %15 = vector.load %arg4[%c3, %c0_15] : memref<16x128xf32, #tpu.memory_space<vmem>>, vector<1x128xf32>
    tpu.vector_store %arg4[%c3, %c0_15], %14 {strides = array<i32>} : memref<16x128xf32, #tpu.memory_space<vmem>>, vector<1x128xf32>,
    %c0_16 = arith.constant 0 : index
    %c2_17 = arith.constant 2 : index
    %16 = memref.load %arg0[%c0_16, %c2_17] : memref<2x8xi32, #tpu.memory_space<smem>>
    %17 = arith.index_cast %16 : i32 to index
    %c0_18 = arith.constant 0 : index
    %18 = vector.load %arg1[%17, %c0_18] : memref<20x128xf32, #tpu.memory_space<vmem>>, vector<1x128xf32>
    %c4 = arith.constant 4 : index
    %c0_19 = arith.constant 0 : index
    %19 = vector.load %arg4[%c4, %c0_19] : memref<16x128xf32, #tpu.memory_space<vmem>>, vector<1x128xf32>
    tpu.vector_store %arg4[%c4, %c0_19], %18 {strides = array<i32>} : memref<16x128xf32, #tpu.memory_space<vmem>>, vector<1x128xf32>,
    %c1_20 = arith.constant 1 : index
    %c2_21 = arith.constant 2 : index
    %20 = memref.load %arg0[%c1_20, %c2_21] : memref<2x8xi32, #tpu.memory_space<smem>>
    %21 = arith.index_cast %20 : i32 to index
    %c0_22 = arith.constant 0 : index
    %22 = vector.load %arg1[%21, %c0_22] : memref<20x128xf32, #tpu.memory_space<vmem>>, vector<1x128xf32>
    %c5 = arith.constant 5 : index
    %c0_23 = arith.constant 0 : index
    %23 = vector.load %arg4[%c5, %c0_23] : memref<16x128xf32, #tpu.memory_space<vmem>>, vector<1x128xf32>
    tpu.vector_store %arg4[%c5, %c0_23], %22 {strides = array<i32>} : memref<16x128xf32, #tpu.memory_space<vmem>>, vector<1x128xf32>,
    %c0_24 = arith.constant 0 : index
    %c3_25 = arith.constant 3 : index
    %24 = memref.load %arg0[%c0_24, %c3_25] : memref<2x8xi32, #tpu.memory_space<smem>>
    %25 = arith.index_cast %24 : i32 to index
    %c0_26 = arith.constant 0 : index
    %26 = vector.load %arg1[%25, %c0_26] : memref<20x128xf32, #tpu.memory_space<vmem>>, vector<1x128xf32>
    %c6 = arith.constant 6 : index
    %c0_27 = arith.constant 0 : index
    %27 = vector.load %arg4[%c6, %c0_27] : memref<16x128xf32, #tpu.memory_space<vmem>>, vector<1x128xf32>
    tpu.vector_store %arg4[%c6, %c0_27], %26 {strides = array<i32>} : memref<16x128xf32, #tpu.memory_space<vmem>>, vector<1x128xf32>,
    %c1_28 = arith.constant 1 : index
    %c3_29 = arith.constant 3 : index
    %28 = memref.load %arg0[%c1_28, %c3_29] : memref<2x8xi32, #tpu.memory_space<smem>>
    %29 = arith.index_cast %28 : i32 to index
    %c0_30 = arith.constant 0 : index
    %30 = vector.load %arg1[%29, %c0_30] : memref<20x128xf32, #tpu.memory_space<vmem>>, vector<1x128xf32>
    %c7 = arith.constant 7 : index
    %c0_31 = arith.constant 0 : index
    %31 = vector.load %arg4[%c7, %c0_31] : memref<16x128xf32, #tpu.memory_space<vmem>>, vector<1x128xf32>
    tpu.vector_store %arg4[%c7, %c0_31], %30 {strides = array<i32>} : memref<16x128xf32, #tpu.memory_space<vmem>>, vector<1x128xf32>,
    %c0_32 = arith.constant 0 : index
    %c4_33 = arith.constant 4 : index
    %32 = memref.load %arg0[%c0_32, %c4_33] : memref<2x8xi32, #tpu.memory_space<smem>>
    %33 = arith.index_cast %32 : i32 to index
    %c0_34 = arith.constant 0 : index
    %34 = vector.load %arg1[%33, %c0_34] : memref<20x128xf32, #tpu.memory_space<vmem>>, vector<1x128xf32>
    %c8 = arith.constant 8 : index
    %c0_35 = arith.constant 0 : index
    %35 = vector.load %arg4[%c8, %c0_35] : memref<16x128xf32, #tpu.memory_space<vmem>>, vector<1x128xf32>
    tpu.vector_store %arg4[%c8, %c0_35], %34 {strides = array<i32>} : memref<16x128xf32, #tpu.memory_space<vmem>>, vector<1x128xf32>,
    %c1_36 = arith.constant 1 : index
    %c4_37 = arith.constant 4 : index
    %36 = memref.load %arg0[%c1_36, %c4_37] : memref<2x8xi32, #tpu.memory_space<smem>>
    %37 = arith.index_cast %36 : i32 to index
    %c0_38 = arith.constant 0 : index
    %38 = vector.load %arg1[%37, %c0_38] : memref<20x128xf32, #tpu.memory_space<vmem>>, vector<1x128xf32>
    %c9 = arith.constant 9 : index
    %c0_39 = arith.constant 0 : index
    %39 = vector.load %arg4[%c9, %c0_39] : memref<16x128xf32, #tpu.memory_space<vmem>>, vector<1x128xf32>
    tpu.vector_store %arg4[%c9, %c0_39], %38 {strides = array<i32>} : memref<16x128xf32, #tpu.memory_space<vmem>>, vector<1x128xf32>,
    %c0_40 = arith.constant 0 : index
    %c5_41 = arith.constant 5 : index
    %40 = memref.load %arg0[%c0_40, %c5_41] : memref<2x8xi32, #tpu.memory_space<smem>>
    %41 = arith.index_cast %40 : i32 to index
    %c0_42 = arith.constant 0 : index
    %42 = vector.load %arg1[%41, %c0_42] : memref<20x128xf32, #tpu.memory_space<vmem>>, vector<1x128xf32>
    %c10 = arith.constant 10 : index
    %c0_43 = arith.constant 0 : index
    %43 = vector.load %arg4[%c10, %c0_43] : memref<16x128xf32, #tpu.memory_space<vmem>>, vector<1x128xf32>
    tpu.vector_store %arg4[%c10, %c0_43], %42 {strides = array<i32>} : memref<16x128xf32, #tpu.memory_space<vmem>>, vector<1x128xf32>,
    %c1_44 = arith.constant 1 : index
    %c5_45 = arith.constant 5 : index
    %44 = memref.load %arg0[%c1_44, %c5_45] : memref<2x8xi32, #tpu.memory_space<smem>>
    %45 = arith.index_cast %44 : i32 to index
    %c0_46 = arith.constant 0 : index
    %46 = vector.load %arg1[%45, %c0_46] : memref<20x128xf32, #tpu.memory_space<vmem>>, vector<1x128xf32>
    %c11 = arith.constant 11 : index
    %c0_47 = arith.constant 0 : index
    %47 = vector.load %arg4[%c11, %c0_47] : memref<16x128xf32, #tpu.memory_space<vmem>>, vector<1x128xf32>
    tpu.vector_store %arg4[%c11, %c0_47], %46 {strides = array<i32>} : memref<16x128xf32, #tpu.memory_space<vmem>>, vector<1x128xf32>,
    %c0_48 = arith.constant 0 : index
    %c6_49 = arith.constant 6 : index
    %48 = memref.load %arg0[%c0_48, %c6_49] : memref<2x8xi32, #tpu.memory_space<smem>>
    %49 = arith.index_cast %48 : i32 to index
    %c0_50 = arith.constant 0 : index
    %50 = vector.load %arg1[%49, %c0_50] : memref<20x128xf32, #tpu.memory_space<vmem>>, vector<1x128xf32>
    %c12 = arith.constant 12 : index
    %c0_51 = arith.constant 0 : index
    %51 = vector.load %arg4[%c12, %c0_51] : memref<16x128xf32, #tpu.memory_space<vmem>>, vector<1x128xf32>
    tpu.vector_store %arg4[%c12, %c0_51], %50 {strides = array<i32>} : memref<16x128xf32, #tpu.memory_space<vmem>>, vector<1x128xf32>,
    %c1_52 = arith.constant 1 : index
    %c6_53 = arith.constant 6 : index
    %52 = memref.load %arg0[%c1_52, %c6_53] : memref<2x8xi32, #tpu.memory_space<smem>>
    %53 = arith.index_cast %52 : i32 to index
    %c0_54 = arith.constant 0 : index
    %54 = vector.load %arg1[%53, %c0_54] : memref<20x128xf32, #tpu.memory_space<vmem>>, vector<1x128xf32>
    %c13 = arith.constant 13 : index
    %c0_55 = arith.constant 0 : index
    %55 = vector.load %arg4[%c13, %c0_55] : memref<16x128xf32, #tpu.memory_space<vmem>>, vector<1x128xf32>
    tpu.vector_store %arg4[%c13, %c0_55], %54 {strides = array<i32>} : memref<16x128xf32, #tpu.memory_space<vmem>>, vector<1x128xf32>,
    %c0_56 = arith.constant 0 : index
    %c7_57 = arith.constant 7 : index
    %56 = memref.load %arg0[%c0_56, %c7_57] : memref<2x8xi32, #tpu.memory_space<smem>>
    %57 = arith.index_cast %56 : i32 to index
    %c0_58 = arith.constant 0 : index
    %58 = vector.load %arg1[%57, %c0_58] : memref<20x128xf32, #tpu.memory_space<vmem>>, vector<1x128xf32>
    %c14 = arith.constant 14 : index
    %c0_59 = arith.constant 0 : index
    %59 = vector.load %arg4[%c14, %c0_59] : memref<16x128xf32, #tpu.memory_space<vmem>>, vector<1x128xf32>
    tpu.vector_store %arg4[%c14, %c0_59], %58 {strides = array<i32>} : memref<16x128xf32, #tpu.memory_space<vmem>>, vector<1x128xf32>,
    %c1_60 = arith.constant 1 : index
    %c7_61 = arith.constant 7 : index
    %60 = memref.load %arg0[%c1_60, %c7_61] : memref<2x8xi32, #tpu.memory_space<smem>>
    %61 = arith.index_cast %60 : i32 to index
    %c0_62 = arith.constant 0 : index
    %62 = vector.load %arg1[%61, %c0_62] : memref<20x128xf32, #tpu.memory_space<vmem>>, vector<1x128xf32>
    %c15 = arith.constant 15 : index
    %c0_63 = arith.constant 0 : index
    %63 = vector.load %arg4[%c15, %c0_63] : memref<16x128xf32, #tpu.memory_space<vmem>>, vector<1x128xf32>
    tpu.vector_store %arg4[%c15, %c0_63], %62 {strides = array<i32>} : memref<16x128xf32, #tpu.memory_space<vmem>>, vector<1x128xf32>,
    %c0_64 = arith.constant 0 : index
    %c0_65 = arith.constant 0 : index
    %c0_66 = arith.constant 0 : index
    %64 = vector.load %arg2[%c0_64, %c0_65, %c0_66] : memref<6x32x128xbf16, #tpu.memory_space<vmem>>, vector<1x32x128xbf16>
    %65 = vector.shape_cast %64 : vector<1x32x128xbf16> to vector<32x128xbf16>
    %cst = arith.constant 0.000000e+00 : f32
    %66 = vector.broadcast %cst : f32 to vector<2x32xf32>
    %cst_67 = arith.constant 0.000000e+00 : f32
    %67 = vector.broadcast %cst_67 : f32 to vector<2x32xf32>
    %c0_68 = arith.constant 0 : index
    %c0_69 = arith.constant 0 : index
    %68 = vector.load %arg4[%c0_68, %c0_69] : memref<16x128xf32, #tpu.memory_space<vmem>>, vector<2x128xf32>
    %69 = arith.truncf %66 : vector<2x32xf32> to vector<2x32xbf16>
    %cst_70 = arith.constant dense<0.000000e+00> : vector<2x128xf32>
    %70 = tpu.matmul %69, %65, %cst_70 {dimension_numbers = #tpu.dot_dimension_numbers<[1], [0], [0], [1], [0, 0, 1, 1], [], []>} : vector<2x32xbf16>, vector<32x128xbf16>, vector<2x128xf32> -> vector<2x128xf32>
    %71 = arith.addf %68, %70 : vector<2x128xf32>
    %72 = vector.extract_strided_slice %71 {offsets = [0, 0], sizes = [2, 96], strides = [1, 1]} : vector<2x128xf32> to vector<2x96xf32>
    %73 = arith.negf %72 : vector<2x96xf32>
    %74 = math.exp %73 : vector<2x96xf32>
    %cst_71 = arith.constant 1.000000e+00 : f32
    %75 = vector.broadcast %cst_71 : f32 to vector<2x96xf32>
    %76 = arith.addf %75, %74 : vector<2x96xf32>
    %77 = arith.divf %75, %76 : vector<2x96xf32>
    %78 = vector.extract_strided_slice %71 {offsets = [0, 96], sizes = [2, 32], strides = [1, 1]} : vector<2x128xf32> to vector<2x32xf32>
    %79 = math.tanh %78 : vector<2x32xf32>
    %80 = vector.extract_strided_slice %77 {offsets = [0, 0], sizes = [2, 32], strides = [1, 1]} : vector<2x96xf32> to vector<2x32xf32>
    %81 = vector.extract_strided_slice %77 {offsets = [0, 32], sizes = [2, 32], strides = [1, 1]} : vector<2x96xf32> to vector<2x32xf32>
    %82 = vector.extract_strided_slice %77 {offsets = [0, 64], sizes = [2, 32], strides = [1, 1]} : vector<2x96xf32> to vector<2x32xf32>
    %83 = arith.mulf %81, %67 : vector<2x32xf32>
    %84 = arith.mulf %80, %79 : vector<2x32xf32>
    %85 = arith.addf %83, %84 : vector<2x32xf32>
    %86 = math.tanh %85 : vector<2x32xf32>
    %87 = arith.mulf %82, %86 : vector<2x32xf32>
    %c0_72 = arith.constant 0 : index
    %c0_73 = arith.constant 0 : index
    %88 = vector.load %arg5[%c0_72, %c0_73] : memref<16x32xf32, #tpu.memory_space<vmem>>, vector<2x32xf32>
    tpu.vector_store %arg5[%c0_72, %c0_73], %87 {strides = array<i32>} : memref<16x32xf32, #tpu.memory_space<vmem>>, vector<2x32xf32>,
    %c2_74 = arith.constant 2 : index
    %c0_75 = arith.constant 0 : index
    %89 = vector.load %arg4[%c2_74, %c0_75] : memref<16x128xf32, #tpu.memory_space<vmem>>, vector<2x128xf32>
    %90 = arith.truncf %87 : vector<2x32xf32> to vector<2x32xbf16>
    %cst_76 = arith.constant dense<0.000000e+00> : vector<2x128xf32>
    %91 = tpu.matmul %90, %65, %cst_76 {dimension_numbers = #tpu.dot_dimension_numbers<[1], [0], [0], [1], [0, 0, 1, 1], [], []>} : vector<2x32xbf16>, vector<32x128xbf16>, vector<2x128xf32> -> vector<2x128xf32>
    %92 = arith.addf %89, %91 : vector<2x128xf32>
    %93 = vector.extract_strided_slice %92 {offsets = [0, 0], sizes = [2, 96], strides = [1, 1]} : vector<2x128xf32> to vector<2x96xf32>
    %94 = arith.negf %93 : vector<2x96xf32>
    %95 = math.exp %94 : vector<2x96xf32>
    %cst_77 = arith.constant 1.000000e+00 : f32
    %96 = vector.broadcast %cst_77 : f32 to vector<2x96xf32>
    %97 = arith.addf %96, %95 : vector<2x96xf32>
    %98 = arith.divf %96, %97 : vector<2x96xf32>
    %99 = vector.extract_strided_slice %92 {offsets = [0, 96], sizes = [2, 32], strides = [1, 1]} : vector<2x128xf32> to vector<2x32xf32>
    %100 = math.tanh %99 : vector<2x32xf32>
    %101 = vector.extract_strided_slice %98 {offsets = [0, 0], sizes = [2, 32], strides = [1, 1]} : vector<2x96xf32> to vector<2x32xf32>
    %102 = vector.extract_strided_slice %98 {offsets = [0, 32], sizes = [2, 32], strides = [1, 1]} : vector<2x96xf32> to vector<2x32xf32>
    %103 = vector.extract_strided_slice %98 {offsets = [0, 64], sizes = [2, 32], strides = [1, 1]} : vector<2x96xf32> to vector<2x32xf32>
    %104 = arith.mulf %102, %85 : vector<2x32xf32>
    %105 = arith.mulf %101, %100 : vector<2x32xf32>
    %106 = arith.addf %104, %105 : vector<2x32xf32>
    %107 = math.tanh %106 : vector<2x32xf32>
    %108 = arith.mulf %103, %107 : vector<2x32xf32>
    %c2_78 = arith.constant 2 : index
    %c0_79 = arith.constant 0 : index
    %109 = vector.load %arg5[%c2_78, %c0_79] : memref<16x32xf32, #tpu.memory_space<vmem>>, vector<2x32xf32>
    tpu.vector_store %arg5[%c2_78, %c0_79], %108 {strides = array<i32>} : memref<16x32xf32, #tpu.memory_space<vmem>>, vector<2x32xf32>,
    %c4_80 = arith.constant 4 : index
    %c0_81 = arith.constant 0 : index
    %110 = vector.load %arg4[%c4_80, %c0_81] : memref<16x128xf32, #tpu.memory_space<vmem>>, vector<2x128xf32>
    %111 = arith.truncf %108 : vector<2x32xf32> to vector<2x32xbf16>
    %cst_82 = arith.constant dense<0.000000e+00> : vector<2x128xf32>
    %112 = tpu.matmul %111, %65, %cst_82 {dimension_numbers = #tpu.dot_dimension_numbers<[1], [0], [0], [1], [0, 0, 1, 1], [], []>} : vector<2x32xbf16>, vector<32x128xbf16>, vector<2x128xf32> -> vector<2x128xf32>
    %113 = arith.addf %110, %112 : vector<2x128xf32>
    %114 = vector.extract_strided_slice %113 {offsets = [0, 0], sizes = [2, 96], strides = [1, 1]} : vector<2x128xf32> to vector<2x96xf32>
    %115 = arith.negf %114 : vector<2x96xf32>
    %116 = math.exp %115 : vector<2x96xf32>
    %cst_83 = arith.constant 1.000000e+00 : f32
    %117 = vector.broadcast %cst_83 : f32 to vector<2x96xf32>
    %118 = arith.addf %117, %116 : vector<2x96xf32>
    %119 = arith.divf %117, %118 : vector<2x96xf32>
    %120 = vector.extract_strided_slice %113 {offsets = [0, 96], sizes = [2, 32], strides = [1, 1]} : vector<2x128xf32> to vector<2x32xf32>
    %121 = math.tanh %120 : vector<2x32xf32>
    %122 = vector.extract_strided_slice %119 {offsets = [0, 0], sizes = [2, 32], strides = [1, 1]} : vector<2x96xf32> to vector<2x32xf32>
    %123 = vector.extract_strided_slice %119 {offsets = [0, 32], sizes = [2, 32], strides = [1, 1]} : vector<2x96xf32> to vector<2x32xf32>
    %124 = vector.extract_strided_slice %119 {offsets = [0, 64], sizes = [2, 32], strides = [1, 1]} : vector<2x96xf32> to vector<2x32xf32>
    %125 = arith.mulf %123, %106 : vector<2x32xf32>
    %126 = arith.mulf %122, %121 : vector<2x32xf32>
    %127 = arith.addf %125, %126 : vector<2x32xf32>
    %128 = math.tanh %127 : vector<2x32xf32>
    %129 = arith.mulf %124, %128 : vector<2x32xf32>
    %c4_84 = arith.constant 4 : index
    %c0_85 = arith.constant 0 : index
    %130 = vector.load %arg5[%c4_84, %c0_85] : memref<16x32xf32, #tpu.memory_space<vmem>>, vector<2x32xf32>
    tpu.vector_store %arg5[%c4_84, %c0_85], %129 {strides = array<i32>} : memref<16x32xf32, #tpu.memory_space<vmem>>, vector<2x32xf32>,
    %c6_86 = arith.constant 6 : index
    %c0_87 = arith.constant 0 : index
    %131 = vector.load %arg4[%c6_86, %c0_87] : memref<16x128xf32, #tpu.memory_space<vmem>>, vector<2x128xf32>
    %132 = arith.truncf %129 : vector<2x32xf32> to vector<2x32xbf16>
    %cst_88 = arith.constant dense<0.000000e+00> : vector<2x128xf32>
    %133 = tpu.matmul %132, %65, %cst_88 {dimension_numbers = #tpu.dot_dimension_numbers<[1], [0], [0], [1], [0, 0, 1, 1], [], []>} : vector<2x32xbf16>, vector<32x128xbf16>, vector<2x128xf32> -> vector<2x128xf32>
    %134 = arith.addf %131, %133 : vector<2x128xf32>
    %135 = vector.extract_strided_slice %134 {offsets = [0, 0], sizes = [2, 96], strides = [1, 1]} : vector<2x128xf32> to vector<2x96xf32>
    %136 = arith.negf %135 : vector<2x96xf32>
    %137 = math.exp %136 : vector<2x96xf32>
    %cst_89 = arith.constant 1.000000e+00 : f32
    %138 = vector.broadcast %cst_89 : f32 to vector<2x96xf32>
    %139 = arith.addf %138, %137 : vector<2x96xf32>
    %140 = arith.divf %138, %139 : vector<2x96xf32>
    %141 = vector.extract_strided_slice %134 {offsets = [0, 96], sizes = [2, 32], strides = [1, 1]} : vector<2x128xf32> to vector<2x32xf32>
    %142 = math.tanh %141 : vector<2x32xf32>
    %143 = vector.extract_strided_slice %140 {offsets = [0, 0], sizes = [2, 32], strides = [1, 1]} : vector<2x96xf32> to vector<2x32xf32>
    %144 = vector.extract_strided_slice %140 {offsets = [0, 32], sizes = [2, 32], strides = [1, 1]} : vector<2x96xf32> to vector<2x32xf32>
    %145 = vector.extract_strided_slice %140 {offsets = [0, 64], sizes = [2, 32], strides = [1, 1]} : vector<2x96xf32> to vector<2x32xf32>
    %146 = arith.mulf %144, %127 : vector<2x32xf32>
    %147 = arith.mulf %143, %142 : vector<2x32xf32>
    %148 = arith.addf %146, %147 : vector<2x32xf32>
    %149 = math.tanh %148 : vector<2x32xf32>
    %150 = arith.mulf %145, %149 : vector<2x32xf32>
    %c6_90 = arith.constant 6 : index
    %c0_91 = arith.constant 0 : index
    %151 = vector.load %arg5[%c6_90, %c0_91] : memref<16x32xf32, #tpu.memory_space<vmem>>, vector<2x32xf32>
    tpu.vector_store %arg5[%c6_90, %c0_91], %150 {strides = array<i32>} : memref<16x32xf32, #tpu.memory_space<vmem>>, vector<2x32xf32>,
    %c8_92 = arith.constant 8 : index
    %c0_93 = arith.constant 0 : index
    %152 = vector.load %arg4[%c8_92, %c0_93] : memref<16x128xf32, #tpu.memory_space<vmem>>, vector<2x128xf32>
    %153 = arith.truncf %150 : vector<2x32xf32> to vector<2x32xbf16>
    %cst_94 = arith.constant dense<0.000000e+00> : vector<2x128xf32>
    %154 = tpu.matmul %153, %65, %cst_94 {dimension_numbers = #tpu.dot_dimension_numbers<[1], [0], [0], [1], [0, 0, 1, 1], [], []>} : vector<2x32xbf16>, vector<32x128xbf16>, vector<2x128xf32> -> vector<2x128xf32>
    %155 = arith.addf %152, %154 : vector<2x128xf32>
    %156 = vector.extract_strided_slice %155 {offsets = [0, 0], sizes = [2, 96], strides = [1, 1]} : vector<2x128xf32> to vector<2x96xf32>
    %157 = arith.negf %156 : vector<2x96xf32>
    %158 = math.exp %157 : vector<2x96xf32>
    %cst_95 = arith.constant 1.000000e+00 : f32
    %159 = vector.broadcast %cst_95 : f32 to vector<2x96xf32>
    %160 = arith.addf %159, %158 : vector<2x96xf32>
    %161 = arith.divf %159, %160 : vector<2x96xf32>
    %162 = vector.extract_strided_slice %155 {offsets = [0, 96], sizes = [2, 32], strides = [1, 1]} : vector<2x128xf32> to vector<2x32xf32>
    %163 = math.tanh %162 : vector<2x32xf32>
    %164 = vector.extract_strided_slice %161 {offsets = [0, 0], sizes = [2, 32], strides = [1, 1]} : vector<2x96xf32> to vector<2x32xf32>
    %165 = vector.extract_strided_slice %161 {offsets = [0, 32], sizes = [2, 32], strides = [1, 1]} : vector<2x96xf32> to vector<2x32xf32>
    %166 = vector.extract_strided_slice %161 {offsets = [0, 64], sizes = [2, 32], strides = [1, 1]} : vector<2x96xf32> to vector<2x32xf32>
    %167 = arith.mulf %165, %148 : vector<2x32xf32>
    %168 = arith.mulf %164, %163 : vector<2x32xf32>
    %169 = arith.addf %167, %168 : vector<2x32xf32>
    %170 = math.tanh %169 : vector<2x32xf32>
    %171 = arith.mulf %166, %170 : vector<2x32xf32>
    %c8_96 = arith.constant 8 : index
    %c0_97 = arith.constant 0 : index
    %172 = vector.load %arg5[%c8_96, %c0_97] : memref<16x32xf32, #tpu.memory_space<vmem>>, vector<2x32xf32>
    tpu.vector_store %arg5[%c8_96, %c0_97], %171 {strides = array<i32>} : memref<16x32xf32, #tpu.memory_space<vmem>>, vector<2x32xf32>,
    %c10_98 = arith.constant 10 : index
    %c0_99 = arith.constant 0 : index
    %173 = vector.load %arg4[%c10_98, %c0_99] : memref<16x128xf32, #tpu.memory_space<vmem>>, vector<2x128xf32>
    %174 = arith.truncf %171 : vector<2x32xf32> to vector<2x32xbf16>
    %cst_100 = arith.constant dense<0.000000e+00> : vector<2x128xf32>
    %175 = tpu.matmul %174, %65, %cst_100 {dimension_numbers = #tpu.dot_dimension_numbers<[1], [0], [0], [1], [0, 0, 1, 1], [], []>} : vector<2x32xbf16>, vector<32x128xbf16>, vector<2x128xf32> -> vector<2x128xf32>
    %176 = arith.addf %173, %175 : vector<2x128xf32>
    %177 = vector.extract_strided_slice %176 {offsets = [0, 0], sizes = [2, 96], strides = [1, 1]} : vector<2x128xf32> to vector<2x96xf32>
    %178 = arith.negf %177 : vector<2x96xf32>
    %179 = math.exp %178 : vector<2x96xf32>
    %cst_101 = arith.constant 1.000000e+00 : f32
    %180 = vector.broadcast %cst_101 : f32 to vector<2x96xf32>
    %181 = arith.addf %180, %179 : vector<2x96xf32>
    %182 = arith.divf %180, %181 : vector<2x96xf32>
    %183 = vector.extract_strided_slice %176 {offsets = [0, 96], sizes = [2, 32], strides = [1, 1]} : vector<2x128xf32> to vector<2x32xf32>
    %184 = math.tanh %183 : vector<2x32xf32>
    %185 = vector.extract_strided_slice %182 {offsets = [0, 0], sizes = [2, 32], strides = [1, 1]} : vector<2x96xf32> to vector<2x32xf32>
    %186 = vector.extract_strided_slice %182 {offsets = [0, 32], sizes = [2, 32], strides = [1, 1]} : vector<2x96xf32> to vector<2x32xf32>
    %187 = vector.extract_strided_slice %182 {offsets = [0, 64], sizes = [2, 32], strides = [1, 1]} : vector<2x96xf32> to vector<2x32xf32>
    %188 = arith.mulf %186, %169 : vector<2x32xf32>
    %189 = arith.mulf %185, %184 : vector<2x32xf32>
    %190 = arith.addf %188, %189 : vector<2x32xf32>
    %191 = math.tanh %190 : vector<2x32xf32>
    %192 = arith.mulf %187, %191 : vector<2x32xf32>
    %c10_102 = arith.constant 10 : index
    %c0_103 = arith.constant 0 : index
    %193 = vector.load %arg5[%c10_102, %c0_103] : memref<16x32xf32, #tpu.memory_space<vmem>>, vector<2x32xf32>
    tpu.vector_store %arg5[%c10_102, %c0_103], %192 {strides = array<i32>} : memref<16x32xf32, #tpu.memory_space<vmem>>, vector<2x32xf32>,
    %c12_104 = arith.constant 12 : index
    %c0_105 = arith.constant 0 : index
    %194 = vector.load %arg4[%c12_104, %c0_105] : memref<16x128xf32, #tpu.memory_space<vmem>>, vector<2x128xf32>
    %195 = arith.truncf %192 : vector<2x32xf32> to vector<2x32xbf16>
    %cst_106 = arith.constant dense<0.000000e+00> : vector<2x128xf32>
    %196 = tpu.matmul %195, %65, %cst_106 {dimension_numbers = #tpu.dot_dimension_numbers<[1], [0], [0], [1], [0, 0, 1, 1], [], []>} : vector<2x32xbf16>, vector<32x128xbf16>, vector<2x128xf32> -> vector<2x128xf32>
    %197 = arith.addf %194, %196 : vector<2x128xf32>
    %198 = vector.extract_strided_slice %197 {offsets = [0, 0], sizes = [2, 96], strides = [1, 1]} : vector<2x128xf32> to vector<2x96xf32>
    %199 = arith.negf %198 : vector<2x96xf32>
    %200 = math.exp %199 : vector<2x96xf32>
    %cst_107 = arith.constant 1.000000e+00 : f32
    %201 = vector.broadcast %cst_107 : f32 to vector<2x96xf32>
    %202 = arith.addf %201, %200 : vector<2x96xf32>
    %203 = arith.divf %201, %202 : vector<2x96xf32>
    %204 = vector.extract_strided_slice %197 {offsets = [0, 96], sizes = [2, 32], strides = [1, 1]} : vector<2x128xf32> to vector<2x32xf32>
    %205 = math.tanh %204 : vector<2x32xf32>
    %206 = vector.extract_strided_slice %203 {offsets = [0, 0], sizes = [2, 32], strides = [1, 1]} : vector<2x96xf32> to vector<2x32xf32>
    %207 = vector.extract_strided_slice %203 {offsets = [0, 32], sizes = [2, 32], strides = [1, 1]} : vector<2x96xf32> to vector<2x32xf32>
    %208 = vector.extract_strided_slice %203 {offsets = [0, 64], sizes = [2, 32], strides = [1, 1]} : vector<2x96xf32> to vector<2x32xf32>
    %209 = arith.mulf %207, %190 : vector<2x32xf32>
    %210 = arith.mulf %206, %205 : vector<2x32xf32>
    %211 = arith.addf %209, %210 : vector<2x32xf32>
    %212 = math.tanh %211 : vector<2x32xf32>
    %213 = arith.mulf %208, %212 : vector<2x32xf32>
    %c12_108 = arith.constant 12 : index
    %c0_109 = arith.constant 0 : index
    %214 = vector.load %arg5[%c12_108, %c0_109] : memref<16x32xf32, #tpu.memory_space<vmem>>, vector<2x32xf32>
    tpu.vector_store %arg5[%c12_108, %c0_109], %213 {strides = array<i32>} : memref<16x32xf32, #tpu.memory_space<vmem>>, vector<2x32xf32>,
    %c14_110 = arith.constant 14 : index
    %c0_111 = arith.constant 0 : index
    %215 = vector.load %arg4[%c14_110, %c0_111] : memref<16x128xf32, #tpu.memory_space<vmem>>, vector<2x128xf32>
    %216 = arith.truncf %213 : vector<2x32xf32> to vector<2x32xbf16>
    %cst_112 = arith.constant dense<0.000000e+00> : vector<2x128xf32>
    %217 = tpu.matmul %216, %65, %cst_112 {dimension_numbers = #tpu.dot_dimension_numbers<[1], [0], [0], [1], [0, 0, 1, 1], [], []>} : vector<2x32xbf16>, vector<32x128xbf16>, vector<2x128xf32> -> vector<2x128xf32>
    %218 = arith.addf %215, %217 : vector<2x128xf32>
    %219 = vector.extract_strided_slice %218 {offsets = [0, 0], sizes = [2, 96], strides = [1, 1]} : vector<2x128xf32> to vector<2x96xf32>
    %220 = arith.negf %219 : vector<2x96xf32>
    %221 = math.exp %220 : vector<2x96xf32>
    %cst_113 = arith.constant 1.000000e+00 : f32
    %222 = vector.broadcast %cst_113 : f32 to vector<2x96xf32>
    %223 = arith.addf %222, %221 : vector<2x96xf32>
    %224 = arith.divf %222, %223 : vector<2x96xf32>
    %225 = vector.extract_strided_slice %218 {offsets = [0, 96], sizes = [2, 32], strides = [1, 1]} : vector<2x128xf32> to vector<2x32xf32>
    %226 = math.tanh %225 : vector<2x32xf32>
    %227 = vector.extract_strided_slice %224 {offsets = [0, 0], sizes = [2, 32], strides = [1, 1]} : vector<2x96xf32> to vector<2x32xf32>
    %228 = vector.extract_strided_slice %224 {offsets = [0, 32], sizes = [2, 32], strides = [1, 1]} : vector<2x96xf32> to vector<2x32xf32>
    %229 = vector.extract_strided_slice %224 {offsets = [0, 64], sizes = [2, 32], strides = [1, 1]} : vector<2x96xf32> to vector<2x32xf32>
    %230 = arith.mulf %228, %211 : vector<2x32xf32>
    %231 = arith.mulf %227, %226 : vector<2x32xf32>
    %232 = arith.addf %230, %231 : vector<2x32xf32>
    %233 = math.tanh %232 : vector<2x32xf32>
    %234 = arith.mulf %229, %233 : vector<2x32xf32>
    %c14_114 = arith.constant 14 : index
    %c0_115 = arith.constant 0 : index
    %235 = vector.load %arg5[%c14_114, %c0_115] : memref<16x32xf32, #tpu.memory_space<vmem>>, vector<2x32xf32>
    tpu.vector_store %arg5[%c14_114, %c0_115], %234 {strides = array<i32>} : memref<16x32xf32, #tpu.memory_space<vmem>>, vector<2x32xf32>,
    %c0_116 = arith.constant 0 : index
    %c0_117 = arith.constant 0 : index
    %236 = vector.load %arg5[%c0_116, %c0_117] : memref<16x32xf32, #tpu.memory_space<vmem>>, vector<16x32xf32>
    %237 = arith.truncf %236 : vector<16x32xf32> to vector<16x32xbf16>
    %c3_118 = arith.constant 3 : index
    %c0_119 = arith.constant 0 : index
    %c0_120 = arith.constant 0 : index
    %238 = vector.load %arg2[%c3_118, %c0_119, %c0_120] : memref<6x32x128xbf16, #tpu.memory_space<vmem>>, vector<1x32x128xbf16>
    %239 = vector.shape_cast %238 : vector<1x32x128xbf16> to vector<32x128xbf16>
    %cst_121 = arith.constant dense<0.000000e+00> : vector<16x128xf32>
    %240 = tpu.matmul %237, %239, %cst_121 {dimension_numbers = #tpu.dot_dimension_numbers<[1], [0], [0], [1], [0, 0, 1, 1], [], []>} : vector<16x32xbf16>, vector<32x128xbf16>, vector<16x128xf32> -> vector<16x128xf32>
    %241 = vector.extract_strided_slice %240 {offsets = [0, 0], sizes = [16, 32], strides = [1, 1]} : vector<16x128xf32> to vector<16x32xf32>
    %c17 = arith.constant 17 : index
    %c0_122 = arith.constant 0 : index
    %242 = vector.load %arg1[%c17, %c0_122] : memref<20x128xf32, #tpu.memory_space<vmem>>, vector<1x32xf32>
    %243 = vector.broadcast %242 : vector<1x32xf32> to vector<16x32xf32>
    %244 = arith.addf %241, %243 : vector<16x32xf32>
    %cst_123 = arith.constant dense<0.000000e+00> : vector<16xf32>
    %245 = vector.multi_reduction <add>, %244, %cst_123 [1] : vector<16x32xf32> to vector<16xf32>
    %246 = vector.shape_cast %245 : vector<16xf32> to vector<16x1xf32>
    %cst_124 = arith.constant 3.200000e+01 : f32
    %247 = vector.broadcast %cst_124 : f32 to vector<16x1xf32>
    %248 = arith.divf %246, %247 : vector<16x1xf32>
    %249 = vector.broadcast %248 : vector<16x1xf32> to vector<16x32xf32>
    %250 = arith.subf %244, %249 : vector<16x32xf32>
    %251 = arith.mulf %250, %250 : vector<16x32xf32>
    %cst_125 = arith.constant dense<0.000000e+00> : vector<16xf32>
    %252 = vector.multi_reduction <add>, %251, %cst_125 [1] : vector<16x32xf32> to vector<16xf32>
    %253 = vector.shape_cast %252 : vector<16xf32> to vector<16x1xf32>
    %cst_126 = arith.constant 3.200000e+01 : f32
    %254 = vector.broadcast %cst_126 : f32 to vector<16x1xf32>
    %255 = arith.divf %253, %254 : vector<16x1xf32>
    %cst_127 = arith.constant 9.99999974E-6 : f32
    %256 = vector.broadcast %cst_127 : f32 to vector<16x1xf32>
    %257 = arith.addf %255, %256 : vector<16x1xf32>
    %258 = math.rsqrt %257 : vector<16x1xf32>
    %259 = vector.broadcast %258 : vector<16x1xf32> to vector<16x32xf32>
    %260 = arith.mulf %250, %259 : vector<16x32xf32>
    %261 = arith.truncf %260 : vector<16x32xf32> to vector<16x32xbf16>
    %c1_128 = arith.constant 1 : index
    %c0_129 = arith.constant 0 : index
    %c0_130 = arith.constant 0 : index
    %262 = vector.load %arg2[%c1_128, %c0_129, %c0_130] : memref<6x32x128xbf16, #tpu.memory_space<vmem>>, vector<1x32x128xbf16>
    %263 = vector.shape_cast %262 : vector<1x32x128xbf16> to vector<32x128xbf16>
    %cst_131 = arith.constant dense<0.000000e+00> : vector<16x128xf32>
    %264 = tpu.matmul %261, %263, %cst_131 {dimension_numbers = #tpu.dot_dimension_numbers<[1], [0], [0], [1], [0, 0, 1, 1], [], []>} : vector<16x32xbf16>, vector<32x128xbf16>, vector<16x128xf32> -> vector<16x128xf32>
    %c16 = arith.constant 16 : index
    %c0_132 = arith.constant 0 : index
    %265 = vector.load %arg1[%c16, %c0_132] : memref<20x128xf32, #tpu.memory_space<vmem>>, vector<1x128xf32>
    %266 = vector.broadcast %265 : vector<1x128xf32> to vector<16x128xf32>
    %267 = arith.addf %264, %266 : vector<16x128xf32>
    %c0_133 = arith.constant 0 : index
    %c0_134 = arith.constant 0 : index
    %268 = vector.load %arg4[%c0_133, %c0_134] : memref<16x128xf32, #tpu.memory_space<vmem>>, vector<16x128xf32>
    tpu.vector_store %arg4[%c0_133, %c0_134], %267 {strides = array<i32>} : memref<16x128xf32, #tpu.memory_space<vmem>>, vector<16x128xf32>,
    %c2_135 = arith.constant 2 : index
    %c0_136 = arith.constant 0 : index
    %c0_137 = arith.constant 0 : index
    %269 = vector.load %arg2[%c2_135, %c0_136, %c0_137] : memref<6x32x128xbf16, #tpu.memory_space<vmem>>, vector<1x32x128xbf16>
    %270 = vector.shape_cast %269 : vector<1x32x128xbf16> to vector<32x128xbf16>
    %cst_138 = arith.constant 0.000000e+00 : f32
    %271 = vector.broadcast %cst_138 : f32 to vector<2x32xf32>
    %cst_139 = arith.constant 0.000000e+00 : f32
    %272 = vector.broadcast %cst_139 : f32 to vector<2x32xf32>
    %c0_140 = arith.constant 0 : index
    %c0_141 = arith.constant 0 : index
    %273 = vector.load %arg4[%c0_140, %c0_141] : memref<16x128xf32, #tpu.memory_space<vmem>>, vector<2x128xf32>
    %274 = arith.truncf %271 : vector<2x32xf32> to vector<2x32xbf16>
    %cst_142 = arith.constant dense<0.000000e+00> : vector<2x128xf32>
    %275 = tpu.matmul %274, %270, %cst_142 {dimension_numbers = #tpu.dot_dimension_numbers<[1], [0], [0], [1], [0, 0, 1, 1], [], []>} : vector<2x32xbf16>, vector<32x128xbf16>, vector<2x128xf32> -> vector<2x128xf32>
    %276 = arith.addf %273, %275 : vector<2x128xf32>
    %277 = vector.extract_strided_slice %276 {offsets = [0, 0], sizes = [2, 96], strides = [1, 1]} : vector<2x128xf32> to vector<2x96xf32>
    %278 = arith.negf %277 : vector<2x96xf32>
    %279 = math.exp %278 : vector<2x96xf32>
    %cst_143 = arith.constant 1.000000e+00 : f32
    %280 = vector.broadcast %cst_143 : f32 to vector<2x96xf32>
    %281 = arith.addf %280, %279 : vector<2x96xf32>
    %282 = arith.divf %280, %281 : vector<2x96xf32>
    %283 = vector.extract_strided_slice %276 {offsets = [0, 96], sizes = [2, 32], strides = [1, 1]} : vector<2x128xf32> to vector<2x32xf32>
    %284 = math.tanh %283 : vector<2x32xf32>
    %285 = vector.extract_strided_slice %282 {offsets = [0, 0], sizes = [2, 32], strides = [1, 1]} : vector<2x96xf32> to vector<2x32xf32>
    %286 = vector.extract_strided_slice %282 {offsets = [0, 32], sizes = [2, 32], strides = [1, 1]} : vector<2x96xf32> to vector<2x32xf32>
    %287 = vector.extract_strided_slice %282 {offsets = [0, 64], sizes = [2, 32], strides = [1, 1]} : vector<2x96xf32> to vector<2x32xf32>
    %288 = arith.mulf %286, %272 : vector<2x32xf32>
    %289 = arith.mulf %285, %284 : vector<2x32xf32>
    %290 = arith.addf %288, %289 : vector<2x32xf32>
    %291 = math.tanh %290 : vector<2x32xf32>
    %292 = arith.mulf %287, %291 : vector<2x32xf32>
    %c0_144 = arith.constant 0 : index
    %c0_145 = arith.constant 0 : index
    %293 = vector.load %arg5[%c0_144, %c0_145] : memref<16x32xf32, #tpu.memory_space<vmem>>, vector<2x32xf32>
    tpu.vector_store %arg5[%c0_144, %c0_145], %292 {strides = array<i32>} : memref<16x32xf32, #tpu.memory_space<vmem>>, vector<2x32xf32>,
    %c2_146 = arith.constant 2 : index
    %c0_147 = arith.constant 0 : index
    %294 = vector.load %arg4[%c2_146, %c0_147] : memref<16x128xf32, #tpu.memory_space<vmem>>, vector<2x128xf32>
    %295 = arith.truncf %292 : vector<2x32xf32> to vector<2x32xbf16>
    %cst_148 = arith.constant dense<0.000000e+00> : vector<2x128xf32>
    %296 = tpu.matmul %295, %270, %cst_148 {dimension_numbers = #tpu.dot_dimension_numbers<[1], [0], [0], [1], [0, 0, 1, 1], [], []>} : vector<2x32xbf16>, vector<32x128xbf16>, vector<2x128xf32> -> vector<2x128xf32>
    %297 = arith.addf %294, %296 : vector<2x128xf32>
    %298 = vector.extract_strided_slice %297 {offsets = [0, 0], sizes = [2, 96], strides = [1, 1]} : vector<2x128xf32> to vector<2x96xf32>
    %299 = arith.negf %298 : vector<2x96xf32>
    %300 = math.exp %299 : vector<2x96xf32>
    %cst_149 = arith.constant 1.000000e+00 : f32
    %301 = vector.broadcast %cst_149 : f32 to vector<2x96xf32>
    %302 = arith.addf %301, %300 : vector<2x96xf32>
    %303 = arith.divf %301, %302 : vector<2x96xf32>
    %304 = vector.extract_strided_slice %297 {offsets = [0, 96], sizes = [2, 32], strides = [1, 1]} : vector<2x128xf32> to vector<2x32xf32>
    %305 = math.tanh %304 : vector<2x32xf32>
    %306 = vector.extract_strided_slice %303 {offsets = [0, 0], sizes = [2, 32], strides = [1, 1]} : vector<2x96xf32> to vector<2x32xf32>
    %307 = vector.extract_strided_slice %303 {offsets = [0, 32], sizes = [2, 32], strides = [1, 1]} : vector<2x96xf32> to vector<2x32xf32>
    %308 = vector.extract_strided_slice %303 {offsets = [0, 64], sizes = [2, 32], strides = [1, 1]} : vector<2x96xf32> to vector<2x32xf32>
    %309 = arith.mulf %307, %290 : vector<2x32xf32>
    %310 = arith.mulf %306, %305 : vector<2x32xf32>
    %311 = arith.addf %309, %310 : vector<2x32xf32>
    %312 = math.tanh %311 : vector<2x32xf32>
    %313 = arith.mulf %308, %312 : vector<2x32xf32>
    %c2_150 = arith.constant 2 : index
    %c0_151 = arith.constant 0 : index
    %314 = vector.load %arg5[%c2_150, %c0_151] : memref<16x32xf32, #tpu.memory_space<vmem>>, vector<2x32xf32>
    tpu.vector_store %arg5[%c2_150, %c0_151], %313 {strides = array<i32>} : memref<16x32xf32, #tpu.memory_space<vmem>>, vector<2x32xf32>,
    %c4_152 = arith.constant 4 : index
    %c0_153 = arith.constant 0 : index
    %315 = vector.load %arg4[%c4_152, %c0_153] : memref<16x128xf32, #tpu.memory_space<vmem>>, vector<2x128xf32>
    %316 = arith.truncf %313 : vector<2x32xf32> to vector<2x32xbf16>
    %cst_154 = arith.constant dense<0.000000e+00> : vector<2x128xf32>
    %317 = tpu.matmul %316, %270, %cst_154 {dimension_numbers = #tpu.dot_dimension_numbers<[1], [0], [0], [1], [0, 0, 1, 1], [], []>} : vector<2x32xbf16>, vector<32x128xbf16>, vector<2x128xf32> -> vector<2x128xf32>
    %318 = arith.addf %315, %317 : vector<2x128xf32>
    %319 = vector.extract_strided_slice %318 {offsets = [0, 0], sizes = [2, 96], strides = [1, 1]} : vector<2x128xf32> to vector<2x96xf32>
    %320 = arith.negf %319 : vector<2x96xf32>
    %321 = math.exp %320 : vector<2x96xf32>
    %cst_155 = arith.constant 1.000000e+00 : f32
    %322 = vector.broadcast %cst_155 : f32 to vector<2x96xf32>
    %323 = arith.addf %322, %321 : vector<2x96xf32>
    %324 = arith.divf %322, %323 : vector<2x96xf32>
    %325 = vector.extract_strided_slice %318 {offsets = [0, 96], sizes = [2, 32], strides = [1, 1]} : vector<2x128xf32> to vector<2x32xf32>
    %326 = math.tanh %325 : vector<2x32xf32>
    %327 = vector.extract_strided_slice %324 {offsets = [0, 0], sizes = [2, 32], strides = [1, 1]} : vector<2x96xf32> to vector<2x32xf32>
    %328 = vector.extract_strided_slice %324 {offsets = [0, 32], sizes = [2, 32], strides = [1, 1]} : vector<2x96xf32> to vector<2x32xf32>
    %329 = vector.extract_strided_slice %324 {offsets = [0, 64], sizes = [2, 32], strides = [1, 1]} : vector<2x96xf32> to vector<2x32xf32>
    %330 = arith.mulf %328, %311 : vector<2x32xf32>
    %331 = arith.mulf %327, %326 : vector<2x32xf32>
    %332 = arith.addf %330, %331 : vector<2x32xf32>
    %333 = math.tanh %332 : vector<2x32xf32>
    %334 = arith.mulf %329, %333 : vector<2x32xf32>
    %c4_156 = arith.constant 4 : index
    %c0_157 = arith.constant 0 : index
    %335 = vector.load %arg5[%c4_156, %c0_157] : memref<16x32xf32, #tpu.memory_space<vmem>>, vector<2x32xf32>
    tpu.vector_store %arg5[%c4_156, %c0_157], %334 {strides = array<i32>} : memref<16x32xf32, #tpu.memory_space<vmem>>, vector<2x32xf32>,
    %c6_158 = arith.constant 6 : index
    %c0_159 = arith.constant 0 : index
    %336 = vector.load %arg4[%c6_158, %c0_159] : memref<16x128xf32, #tpu.memory_space<vmem>>, vector<2x128xf32>
    %337 = arith.truncf %334 : vector<2x32xf32> to vector<2x32xbf16>
    %cst_160 = arith.constant dense<0.000000e+00> : vector<2x128xf32>
    %338 = tpu.matmul %337, %270, %cst_160 {dimension_numbers = #tpu.dot_dimension_numbers<[1], [0], [0], [1], [0, 0, 1, 1], [], []>} : vector<2x32xbf16>, vector<32x128xbf16>, vector<2x128xf32> -> vector<2x128xf32>
    %339 = arith.addf %336, %338 : vector<2x128xf32>
    %340 = vector.extract_strided_slice %339 {offsets = [0, 0], sizes = [2, 96], strides = [1, 1]} : vector<2x128xf32> to vector<2x96xf32>
    %341 = arith.negf %340 : vector<2x96xf32>
    %342 = math.exp %341 : vector<2x96xf32>
    %cst_161 = arith.constant 1.000000e+00 : f32
    %343 = vector.broadcast %cst_161 : f32 to vector<2x96xf32>
    %344 = arith.addf %343, %342 : vector<2x96xf32>
    %345 = arith.divf %343, %344 : vector<2x96xf32>
    %346 = vector.extract_strided_slice %339 {offsets = [0, 96], sizes = [2, 32], strides = [1, 1]} : vector<2x128xf32> to vector<2x32xf32>
    %347 = math.tanh %346 : vector<2x32xf32>
    %348 = vector.extract_strided_slice %345 {offsets = [0, 0], sizes = [2, 32], strides = [1, 1]} : vector<2x96xf32> to vector<2x32xf32>
    %349 = vector.extract_strided_slice %345 {offsets = [0, 32], sizes = [2, 32], strides = [1, 1]} : vector<2x96xf32> to vector<2x32xf32>
    %350 = vector.extract_strided_slice %345 {offsets = [0, 64], sizes = [2, 32], strides = [1, 1]} : vector<2x96xf32> to vector<2x32xf32>
    %351 = arith.mulf %349, %332 : vector<2x32xf32>
    %352 = arith.mulf %348, %347 : vector<2x32xf32>
    %353 = arith.addf %351, %352 : vector<2x32xf32>
    %354 = math.tanh %353 : vector<2x32xf32>
    %355 = arith.mulf %350, %354 : vector<2x32xf32>
    %c6_162 = arith.constant 6 : index
    %c0_163 = arith.constant 0 : index
    %356 = vector.load %arg5[%c6_162, %c0_163] : memref<16x32xf32, #tpu.memory_space<vmem>>, vector<2x32xf32>
    tpu.vector_store %arg5[%c6_162, %c0_163], %355 {strides = array<i32>} : memref<16x32xf32, #tpu.memory_space<vmem>>, vector<2x32xf32>,
    %c8_164 = arith.constant 8 : index
    %c0_165 = arith.constant 0 : index
    %357 = vector.load %arg4[%c8_164, %c0_165] : memref<16x128xf32, #tpu.memory_space<vmem>>, vector<2x128xf32>
    %358 = arith.truncf %355 : vector<2x32xf32> to vector<2x32xbf16>
    %cst_166 = arith.constant dense<0.000000e+00> : vector<2x128xf32>
    %359 = tpu.matmul %358, %270, %cst_166 {dimension_numbers = #tpu.dot_dimension_numbers<[1], [0], [0], [1], [0, 0, 1, 1], [], []>} : vector<2x32xbf16>, vector<32x128xbf16>, vector<2x128xf32> -> vector<2x128xf32>
    %360 = arith.addf %357, %359 : vector<2x128xf32>
    %361 = vector.extract_strided_slice %360 {offsets = [0, 0], sizes = [2, 96], strides = [1, 1]} : vector<2x128xf32> to vector<2x96xf32>
    %362 = arith.negf %361 : vector<2x96xf32>
    %363 = math.exp %362 : vector<2x96xf32>
    %cst_167 = arith.constant 1.000000e+00 : f32
    %364 = vector.broadcast %cst_167 : f32 to vector<2x96xf32>
    %365 = arith.addf %364, %363 : vector<2x96xf32>
    %366 = arith.divf %364, %365 : vector<2x96xf32>
    %367 = vector.extract_strided_slice %360 {offsets = [0, 96], sizes = [2, 32], strides = [1, 1]} : vector<2x128xf32> to vector<2x32xf32>
    %368 = math.tanh %367 : vector<2x32xf32>
    %369 = vector.extract_strided_slice %366 {offsets = [0, 0], sizes = [2, 32], strides = [1, 1]} : vector<2x96xf32> to vector<2x32xf32>
    %370 = vector.extract_strided_slice %366 {offsets = [0, 32], sizes = [2, 32], strides = [1, 1]} : vector<2x96xf32> to vector<2x32xf32>
    %371 = vector.extract_strided_slice %366 {offsets = [0, 64], sizes = [2, 32], strides = [1, 1]} : vector<2x96xf32> to vector<2x32xf32>
    %372 = arith.mulf %370, %353 : vector<2x32xf32>
    %373 = arith.mulf %369, %368 : vector<2x32xf32>
    %374 = arith.addf %372, %373 : vector<2x32xf32>
    %375 = math.tanh %374 : vector<2x32xf32>
    %376 = arith.mulf %371, %375 : vector<2x32xf32>
    %c8_168 = arith.constant 8 : index
    %c0_169 = arith.constant 0 : index
    %377 = vector.load %arg5[%c8_168, %c0_169] : memref<16x32xf32, #tpu.memory_space<vmem>>, vector<2x32xf32>
    tpu.vector_store %arg5[%c8_168, %c0_169], %376 {strides = array<i32>} : memref<16x32xf32, #tpu.memory_space<vmem>>, vector<2x32xf32>,
    %c10_170 = arith.constant 10 : index
    %c0_171 = arith.constant 0 : index
    %378 = vector.load %arg4[%c10_170, %c0_171] : memref<16x128xf32, #tpu.memory_space<vmem>>, vector<2x128xf32>
    %379 = arith.truncf %376 : vector<2x32xf32> to vector<2x32xbf16>
    %cst_172 = arith.constant dense<0.000000e+00> : vector<2x128xf32>
    %380 = tpu.matmul %379, %270, %cst_172 {dimension_numbers = #tpu.dot_dimension_numbers<[1], [0], [0], [1], [0, 0, 1, 1], [], []>} : vector<2x32xbf16>, vector<32x128xbf16>, vector<2x128xf32> -> vector<2x128xf32>
    %381 = arith.addf %378, %380 : vector<2x128xf32>
    %382 = vector.extract_strided_slice %381 {offsets = [0, 0], sizes = [2, 96], strides = [1, 1]} : vector<2x128xf32> to vector<2x96xf32>
    %383 = arith.negf %382 : vector<2x96xf32>
    %384 = math.exp %383 : vector<2x96xf32>
    %cst_173 = arith.constant 1.000000e+00 : f32
    %385 = vector.broadcast %cst_173 : f32 to vector<2x96xf32>
    %386 = arith.addf %385, %384 : vector<2x96xf32>
    %387 = arith.divf %385, %386 : vector<2x96xf32>
    %388 = vector.extract_strided_slice %381 {offsets = [0, 96], sizes = [2, 32], strides = [1, 1]} : vector<2x128xf32> to vector<2x32xf32>
    %389 = math.tanh %388 : vector<2x32xf32>
    %390 = vector.extract_strided_slice %387 {offsets = [0, 0], sizes = [2, 32], strides = [1, 1]} : vector<2x96xf32> to vector<2x32xf32>
    %391 = vector.extract_strided_slice %387 {offsets = [0, 32], sizes = [2, 32], strides = [1, 1]} : vector<2x96xf32> to vector<2x32xf32>
    %392 = vector.extract_strided_slice %387 {offsets = [0, 64], sizes = [2, 32], strides = [1, 1]} : vector<2x96xf32> to vector<2x32xf32>
    %393 = arith.mulf %391, %374 : vector<2x32xf32>
    %394 = arith.mulf %390, %389 : vector<2x32xf32>
    %395 = arith.addf %393, %394 : vector<2x32xf32>
    %396 = math.tanh %395 : vector<2x32xf32>
    %397 = arith.mulf %392, %396 : vector<2x32xf32>
    %c10_174 = arith.constant 10 : index
    %c0_175 = arith.constant 0 : index
    %398 = vector.load %arg5[%c10_174, %c0_175] : memref<16x32xf32, #tpu.memory_space<vmem>>, vector<2x32xf32>
    tpu.vector_store %arg5[%c10_174, %c0_175], %397 {strides = array<i32>} : memref<16x32xf32, #tpu.memory_space<vmem>>, vector<2x32xf32>,
    %c12_176 = arith.constant 12 : index
    %c0_177 = arith.constant 0 : index
    %399 = vector.load %arg4[%c12_176, %c0_177] : memref<16x128xf32, #tpu.memory_space<vmem>>, vector<2x128xf32>
    %400 = arith.truncf %397 : vector<2x32xf32> to vector<2x32xbf16>
    %cst_178 = arith.constant dense<0.000000e+00> : vector<2x128xf32>
    %401 = tpu.matmul %400, %270, %cst_178 {dimension_numbers = #tpu.dot_dimension_numbers<[1], [0], [0], [1], [0, 0, 1, 1], [], []>} : vector<2x32xbf16>, vector<32x128xbf16>, vector<2x128xf32> -> vector<2x128xf32>
    %402 = arith.addf %399, %401 : vector<2x128xf32>
    %403 = vector.extract_strided_slice %402 {offsets = [0, 0], sizes = [2, 96], strides = [1, 1]} : vector<2x128xf32> to vector<2x96xf32>
    %404 = arith.negf %403 : vector<2x96xf32>
    %405 = math.exp %404 : vector<2x96xf32>
    %cst_179 = arith.constant 1.000000e+00 : f32
    %406 = vector.broadcast %cst_179 : f32 to vector<2x96xf32>
    %407 = arith.addf %406, %405 : vector<2x96xf32>
    %408 = arith.divf %406, %407 : vector<2x96xf32>
    %409 = vector.extract_strided_slice %402 {offsets = [0, 96], sizes = [2, 32], strides = [1, 1]} : vector<2x128xf32> to vector<2x32xf32>
    %410 = math.tanh %409 : vector<2x32xf32>
    %411 = vector.extract_strided_slice %408 {offsets = [0, 0], sizes = [2, 32], strides = [1, 1]} : vector<2x96xf32> to vector<2x32xf32>
    %412 = vector.extract_strided_slice %408 {offsets = [0, 32], sizes = [2, 32], strides = [1, 1]} : vector<2x96xf32> to vector<2x32xf32>
    %413 = vector.extract_strided_slice %408 {offsets = [0, 64], sizes = [2, 32], strides = [1, 1]} : vector<2x96xf32> to vector<2x32xf32>
    %414 = arith.mulf %412, %395 : vector<2x32xf32>
    %415 = arith.mulf %411, %410 : vector<2x32xf32>
    %416 = arith.addf %414, %415 : vector<2x32xf32>
    %417 = math.tanh %416 : vector<2x32xf32>
    %418 = arith.mulf %413, %417 : vector<2x32xf32>
    %c12_180 = arith.constant 12 : index
    %c0_181 = arith.constant 0 : index
    %419 = vector.load %arg5[%c12_180, %c0_181] : memref<16x32xf32, #tpu.memory_space<vmem>>, vector<2x32xf32>
    tpu.vector_store %arg5[%c12_180, %c0_181], %418 {strides = array<i32>} : memref<16x32xf32, #tpu.memory_space<vmem>>, vector<2x32xf32>,
    %c14_182 = arith.constant 14 : index
    %c0_183 = arith.constant 0 : index
    %420 = vector.load %arg4[%c14_182, %c0_183] : memref<16x128xf32, #tpu.memory_space<vmem>>, vector<2x128xf32>
    %421 = arith.truncf %418 : vector<2x32xf32> to vector<2x32xbf16>
    %cst_184 = arith.constant dense<0.000000e+00> : vector<2x128xf32>
    %422 = tpu.matmul %421, %270, %cst_184 {dimension_numbers = #tpu.dot_dimension_numbers<[1], [0], [0], [1], [0, 0, 1, 1], [], []>} : vector<2x32xbf16>, vector<32x128xbf16>, vector<2x128xf32> -> vector<2x128xf32>
    %423 = arith.addf %420, %422 : vector<2x128xf32>
    %424 = vector.extract_strided_slice %423 {offsets = [0, 0], sizes = [2, 96], strides = [1, 1]} : vector<2x128xf32> to vector<2x96xf32>
    %425 = arith.negf %424 : vector<2x96xf32>
    %426 = math.exp %425 : vector<2x96xf32>
    %cst_185 = arith.constant 1.000000e+00 : f32
    %427 = vector.broadcast %cst_185 : f32 to vector<2x96xf32>
    %428 = arith.addf %427, %426 : vector<2x96xf32>
    %429 = arith.divf %427, %428 : vector<2x96xf32>
    %430 = vector.extract_strided_slice %423 {offsets = [0, 96], sizes = [2, 32], strides = [1, 1]} : vector<2x128xf32> to vector<2x32xf32>
    %431 = math.tanh %430 : vector<2x32xf32>
    %432 = vector.extract_strided_slice %429 {offsets = [0, 0], sizes = [2, 32], strides = [1, 1]} : vector<2x96xf32> to vector<2x32xf32>
    %433 = vector.extract_strided_slice %429 {offsets = [0, 32], sizes = [2, 32], strides = [1, 1]} : vector<2x96xf32> to vector<2x32xf32>
    %434 = vector.extract_strided_slice %429 {offsets = [0, 64], sizes = [2, 32], strides = [1, 1]} : vector<2x96xf32> to vector<2x32xf32>
    %435 = arith.mulf %433, %416 : vector<2x32xf32>
    %436 = arith.mulf %432, %431 : vector<2x32xf32>
    %437 = arith.addf %435, %436 : vector<2x32xf32>
    %438 = math.tanh %437 : vector<2x32xf32>
    %439 = arith.mulf %434, %438 : vector<2x32xf32>
    %c14_186 = arith.constant 14 : index
    %c0_187 = arith.constant 0 : index
    %440 = vector.load %arg5[%c14_186, %c0_187] : memref<16x32xf32, #tpu.memory_space<vmem>>, vector<2x32xf32>
    tpu.vector_store %arg5[%c14_186, %c0_187], %439 {strides = array<i32>} : memref<16x32xf32, #tpu.memory_space<vmem>>, vector<2x32xf32>,
    %c0_188 = arith.constant 0 : index
    %c0_189 = arith.constant 0 : index
    %441 = tpu.strided_load %arg5[%c0_188, %c0_189] {strides = array<i32: 2, 1>} : memref<16x32xf32, #tpu.memory_space<vmem>>, vector<8x32xf32>
    %c1_190 = arith.constant 1 : index
    %c0_191 = arith.constant 0 : index
    %442 = tpu.strided_load %arg5[%c1_190, %c0_191] {strides = array<i32: 2, 1>} : memref<16x32xf32, #tpu.memory_space<vmem>>, vector<8x32xf32>
    %443 = tpu.concatenate %441, %442 in 0 : vector<8x32xf32>, vector<8x32xf32> -> vector<16x32xf32>
    %444 = arith.truncf %443 : vector<16x32xf32> to vector<16x32xbf16>
    %c4_192 = arith.constant 4 : index
    %c0_193 = arith.constant 0 : index
    %c0_194 = arith.constant 0 : index
    %445 = vector.load %arg2[%c4_192, %c0_193, %c0_194] : memref<6x32x128xbf16, #tpu.memory_space<vmem>>, vector<1x32x128xbf16>
    %446 = vector.shape_cast %445 : vector<1x32x128xbf16> to vector<32x128xbf16>
    %cst_195 = arith.constant dense<0.000000e+00> : vector<16x128xf32>
    %447 = tpu.matmul %444, %446, %cst_195 {dimension_numbers = #tpu.dot_dimension_numbers<[1], [0], [0], [1], [0, 0, 1, 1], [], []>} : vector<16x32xbf16>, vector<32x128xbf16>, vector<16x128xf32> -> vector<16x128xf32>
    %448 = vector.extract_strided_slice %447 {offsets = [0, 0], sizes = [16, 32], strides = [1, 1]} : vector<16x128xf32> to vector<16x32xf32>
    %c18 = arith.constant 18 : index
    %c0_196 = arith.constant 0 : index
    %449 = vector.load %arg1[%c18, %c0_196] : memref<20x128xf32, #tpu.memory_space<vmem>>, vector<1x32xf32>
    %450 = vector.broadcast %449 : vector<1x32xf32> to vector<16x32xf32>
    %451 = arith.addf %448, %450 : vector<16x32xf32>
    %452 = arith.truncf %451 : vector<16x32xf32> to vector<16x32xbf16>
    %c5_197 = arith.constant 5 : index
    %c0_198 = arith.constant 0 : index
    %c0_199 = arith.constant 0 : index
    %453 = vector.load %arg2[%c5_197, %c0_198, %c0_199] : memref<6x32x128xbf16, #tpu.memory_space<vmem>>, vector<1x32x128xbf16>
    %454 = vector.shape_cast %453 : vector<1x32x128xbf16> to vector<32x128xbf16>
    %cst_200 = arith.constant dense<0.000000e+00> : vector<16x128xf32>
    %455 = tpu.matmul %452, %454, %cst_200 {dimension_numbers = #tpu.dot_dimension_numbers<[1], [0], [0], [1], [0, 0, 1, 1], [], []>} : vector<16x32xbf16>, vector<32x128xbf16>, vector<16x128xf32> -> vector<16x128xf32>
    %c19 = arith.constant 19 : index
    %c0_201 = arith.constant 0 : index
    %456 = vector.load %arg1[%c19, %c0_201] : memref<20x128xf32, #tpu.memory_space<vmem>>, vector<1x128xf32>
    %457 = vector.broadcast %456 : vector<1x128xf32> to vector<16x128xf32>
    %458 = arith.addf %455, %457 : vector<16x128xf32>
    %c0_202 = arith.constant 0 : index
    %c0_203 = arith.constant 0 : index
    %459 = vector.load %arg3[%c0_202, %c0_203] : memref<16x128xf32, #tpu.memory_space<vmem>>, vector<16x128xf32>
    tpu.vector_store %arg3[%c0_202, %c0_203], %458 {strides = array<i32>} : memref<16x128xf32, #tpu.memory_space<vmem>>, vector<16x128xf32>,
    return
  }
}

</mosaic_0001>

<llo_original>
// kernel: forward.1
$region0: #{forward.1}
  #allocation0 [shape = 'u32[]', space=smem, size = 0x4, offset = 0x4, fixed_abs, tag = 'smem constant byte address 0x4 - core index']
  #allocation1 [shape = 'u32[144,128]{1,0:T(1,128)}', space=vmem, size = 0x12000, scoped, tag = 'internal scratch']
  #allocation2 [shape = 'f32[16,128]{1,0:T(8,128)}', space=vmem, size = 0x2000, scoped, tag = 'scratch operand']
  #allocation3 [shape = 'f32[16,32]{1,0:T(8,128)}', space=vmem, size = 0x2000, scoped, tag = 'scratch operand']
  %s0 = inlined_call_operand.hbm [shape: s32[2,8], index: 0, kind: input, shape index: {}]
  %s1 = inlined_call_operand.hbm [shape: f32[20,128], index: 1, kind: input, shape index: {}]
  %s2 = inlined_call_operand.hbm [shape: bf16[6,32,128], index: 2, kind: input, shape index: {}]
  %s3 = inlined_call_operand.vmem [shape: f32[16,128], index: 3, kind: output, shape index: {}]
  %s4 = sld [smem:[#allocation0]]
  $region34: #{forward.1} parent=0
    _
  %s6 = ssub.s32 1, %s4
  %s7 = scalar_select 0, %s6, %s4
  $region1: #{forward.1} parent=0
    #allocation4 [shape = 'u8[1024]{0}', space=smem, size = 0x400, scoped, tag = 'input window, operand 0, single buffered']
    #allocation5 [shape = 's32[1]{0}', space=sflag, size = 0x4, scoped, tag = 'scoped memory for forward.1']
    #allocation6 [shape = 's32[1]{0}', space=sflag, size = 0x4, scoped, tag = 'scoped memory for forward.1']
    #allocation7 [shape = 'u8[12288]{0}', space=vmem, size = 0x3000, scoped, tag = 'input window, operand 1, single buffered']
    #allocation8 [shape = 'u8[49152]{0}', space=vmem, size = 0xc000, scoped, tag = 'input window, operand 2, single buffered']
    #allocation9 [shape = 's32[1]{0}', space=sflag, size = 0x4, scoped, tag = 'scoped memory for forward.1']
    %8 = vsyncpa [#allocation6], 0
    %9 = vsyncpa [#allocation5], 0
    %10 = vsyncpa [#allocation9], 0
    // Predicated region
    $region2: #{forward.1} parent=1 // pred_check
      _
    $region3: #{forward.1} parent=1 // pred_check_branch
      %12 = sbr.rel (0) target = $region5
    $region4: #{forward.1} parent=1 // pred_region
      %s14 = ssub.s32 32, 32
      %15 = vsyncadd [#allocation6], %s14
      %18 = dma.hbm_to_smem %s0, 32, [#allocation4], [#allocation6]
    $region5: #{forward.1} parent=1 // pred_fallthru
      _
    // Predicated region
    $region6: #{forward.1} parent=1 // pred_check
      _
    $region7: #{forward.1} parent=1 // pred_check_branch
      %20 = sbr.rel (0) target = $region9
    $region8: #{forward.1} parent=1 // pred_region
      %s22 = ssub.s32 384, 384
      %23 = vsyncadd [#allocation5], %s22
      %s24 = sshll.u32 [#allocation7], 4
      %s25 = int_to_ptr.vmem [resolvable:$true] %s24
      %30 = dma.hbm_to_vmem [thread:$0]  %s1, 384, %s25, [#allocation5], 128, 128, 8
    $region9: #{forward.1} parent=1 // pred_fallthru
      _
    // Predicated region
    $region10: #{forward.1} parent=1 // pred_check
      _
    $region11: #{forward.1} parent=1 // pred_check_branch
      %32 = sbr.rel (0) target = $region13
    $region12: #{forward.1} parent=1 // pred_region
      %s34 = ssub.s32 1536, 1536
      %35 = vsyncadd [#allocation9], %s34
      %s36 = sshll.u32 [#allocation8], 4
      %s37 = int_to_ptr.vmem [resolvable:$true] %s36
      %42 = dma.hbm_to_vmem [thread:$0]  %s2, 1536, %s37, [#allocation9], 64, 64, 4
    $region13: #{forward.1} parent=1 // pred_fallthru
      _
    // Predicated region
    $region14: #{forward.1} parent=1 // pred_check
      _
    $region15: #{forward.1} parent=1 // pred_check_branch
      %44 = sbr.rel (0) target = $region17
    $region16: #{forward.1} parent=1 // pred_region
      %45 = dma.done [#allocation6], 32
    $region17: #{forward.1} parent=1 // pred_fallthru
      _
    // Predicated region
    $region18: #{forward.1} parent=1 // pred_check
      _
    $region19: #{forward.1} parent=1 // pred_check_branch
      %47 = sbr.rel (0) target = $region21
    $region20: #{forward.1} parent=1 // pred_region
      %48 = dma.done [#allocation5], 384
    $region21: #{forward.1} parent=1 // pred_fallthru
      _
    // Predicated region
    $region22: #{forward.1} parent=1 // pred_check
      _
    $region23: #{forward.1} parent=1 // pred_check_branch
      %50 = sbr.rel (0) target = $region25
    $region24: #{forward.1} parent=1 // pred_region
      %51 = dma.done [#allocation9], 1536
    $region25: #{forward.1} parent=1 // pred_fallthru
      _
    %52 = sfence
    %s54 = sld [smem:[#allocation4]]
    %s55 = scalar_lea.vmem [#allocation7], %s54
    %v56 = vld [vmem:[%s55] sm:$0x1]
    %57 = vst [vmem:[#allocation2] sm:$0x1] %v56
    %s58 = sld [smem:[#allocation4 + $0x80]]
    %s59 = scalar_lea.vmem [#allocation7], %s58
    %v60 = vld [vmem:[%s59] sm:$0x1]
    %61 = vst [vmem:[#allocation2 + $0x1] sm:$0x1] %v60
    %s62 = sld [smem:[#allocation4 + $0x1]]
    %s63 = scalar_lea.vmem [#allocation7], %s62
    %v64 = vld [vmem:[%s63] sm:$0x1]
    %65 = vst [vmem:[#allocation2 + $0x2] sm:$0x1] %v64
    %s66 = sld [smem:[#allocation4 + $0x81]]
    %s67 = scalar_lea.vmem [#allocation7], %s66
    %v68 = vld [vmem:[%s67] sm:$0x1]
    %69 = vst [vmem:[#allocation2 + $0x3] sm:$0x1] %v68
    %s70 = sld [smem:[#allocation4 + $0x2]]
    %s71 = scalar_lea.vmem [#allocation7], %s70
    %v72 = vld [vmem:[%s71] sm:$0x1]
    %73 = vst [vmem:[#allocation2 + $0x4] sm:$0x1] %v72
    %s74 = sld [smem:[#allocation4 + $0x82]]
    %s75 = scalar_lea.vmem [#allocation7], %s74
    %v76 = vld [vmem:[%s75] sm:$0x1]
    %77 = vst [vmem:[#allocation2 + $0x5] sm:$0x1] %v76
    %s78 = sld [smem:[#allocation4 + $0x3]]
    %s79 = scalar_lea.vmem [#allocation7], %s78
    %v80 = vld [vmem:[%s79] sm:$0x1]
    %81 = vst [vmem:[#allocation2 + $0x6] sm:$0x1] %v80
    %s82 = sld [smem:[#allocation4 + $0x83]]
    %s83 = scalar_lea.vmem [#allocation7], %s82
    %v84 = vld [vmem:[%s83] sm:$0x1]
    %85 = vst [vmem:[#allocation2 + $0x7] sm:$0x1] %v84
    %s86 = sld [smem:[#allocation4 + $0x4]]
    %s87 = scalar_lea.vmem [#allocation7], %s86
    %v88 = vld [vmem:[%s87] sm:$0x1]
    %89 = vst [vmem:[#allocation2 + $0x8] sm:$0x1] %v88
    %s90 = sld [smem:[#allocation4 + $0x84]]
    %s91 = scalar_lea.vmem [#allocation7], %s90
    %v92 = vld [vmem:[%s91] sm:$0x1]
    %93 = vst [vmem:[#allocation2 + $0x9] sm:$0x1] %v92
    %s94 = sld [smem:[#allocation4 + $0x5]]
    %s95 = scalar_lea.vmem [#allocation7], %s94
    %v96 = vld [vmem:[%s95] sm:$0x1]
    %97 = vst [vmem:[#allocation2 + $0xa] sm:$0x1] %v96
    %s98 = sld [smem:[#allocation4 + $0x85]]
    %s99 = scalar_lea.vmem [#allocation7], %s98
    %v100 = vld [vmem:[%s99] sm:$0x1]
    %101 = vst [vmem:[#allocation2 + $0xb] sm:$0x1] %v100
    %s102 = sld [smem:[#allocation4 + $0x6]]
    %s103 = scalar_lea.vmem [#allocation7], %s102
    %v104 = vld [vmem:[%s103] sm:$0x1]
    %105 = vst [vmem:[#allocation2 + $0xc] sm:$0x1] %v104
    %s106 = sld [smem:[#allocation4 + $0x86]]
    %s107 = scalar_lea.vmem [#allocation7], %s106
    %v108 = vld [vmem:[%s107] sm:$0x1]
    %109 = vst [vmem:[#allocation2 + $0xd] sm:$0x1] %v108
    %s110 = sld [smem:[#allocation4 + $0x7]]
    %s111 = scalar_lea.vmem [#allocation7], %s110
    %v112 = vld [vmem:[%s111] sm:$0x1]
    %113 = vst [vmem:[#allocation2 + $0xe] sm:$0x1] %v112
    %s114 = sld [smem:[#allocation4 + $0x87]]
    %s115 = scalar_lea.vmem [#allocation7], %s114
    %v116 = vld [vmem:[%s115] sm:$0x1]
    %117 = vst [vmem:[#allocation2 + $0xf] sm:$0x1] %v116
    %v118 = vld [vmem:[#allocation8] sm:$0xf]
    %v119 = vld [vmem:[#allocation8 + $0x4] sm:$0xf]
    %v120 = vld [vmem:[#allocation8 + $0x8] sm:$0xf]
    %v121 = vld [vmem:[#allocation8 + $0xc] sm:$0xf]
    %v122 = vld [vmem:[#allocation2] sm:$0x3]
    %v127 = vunpack.c.l.b16 %v118
    %v128 = vunpack.c.l.b16 %v119
    %v129 = vunpack.c.l.b16 %v120
    %v130 = vunpack.c.l.b16 %v121
    %v131 = vpack.c.b16 %v128, %v127
    %v132 = vpack.c.b16 %v130, %v129
    %vm135 = vcmask 261120
    %v137 = vsel %vm135, 0, 0
    %139 = vmatprep.subr.bf16.mxu0 0
    %140 = vmatpush1.bf16.msra.mxu0 %v131
    %141 = vmatprep.subr.bf16.mxu0 0
    %142 = vmatpush1.bf16.msra.mxu0 %v132
    %143 = vmatprep.subr.bf16.mxu0 0
    %144 = vmatpush1.bf16.msra.mxu0 0
    %145 = vmatprep.subr.bf16.mxu0 0
    %146 = vmatpush1.bf16.msra.mxu0 0
    %147 = vmatprep.subr.bf16.mxu0 0
    %148 = vmatpush1.bf16.msra.mxu0 0
    %149 = vmatprep.subr.bf16.mxu0 0
    %150 = vmatpush1.bf16.msra.mxu0 0
    %151 = vmatprep.subr.bf16.mxu0 0
    %152 = vmatpush1.bf16.msra.mxu0 0
    %153 = vmatprep.subr.bf16.mxu0 0
    %154 = vmatpush1.bf16.msra.mxu0 0
    %155 = vmatprep.subr.bf16.mxu0 0
    %156 = vmatpush1.bf16.msra.mxu0 0
    %157 = vmatprep.subr.bf16.mxu0 0
    %158 = vmatpush1.bf16.msra.mxu0 0
    %159 = vmatprep.subr.bf16.mxu0 0
    %160 = vmatpush1.bf16.msra.mxu0 0
    %161 = vmatprep.subr.bf16.mxu0 0
    %162 = vmatpush1.bf16.msra.mxu0 0
    %163 = vmatprep.subr.bf16.mxu0 0
    %164 = vmatpush1.bf16.msra.mxu0 0
    %165 = vmatprep.subr.bf16.mxu0 0
    %166 = vmatpush1.bf16.msra.mxu0 0
    %167 = vmatprep.subr.bf16.mxu0 0
    %168 = vmatpush1.bf16.msra.mxu0 0
    %169 = vmatprep.subr.bf16.mxu0 0
    %170 = vmatpush1.bf16.msra.mxu0 0
    %171 = vmatprep.mubr.bf16.mxu0 0
    %172 = vmatmul.mubr.bf16.gmra.mrb[0].mxu0 %v137
    %v173 = vpop.f32.mrb[0].mxu0
    %v174 = vadd.f32 0.0, %v173
    %v175 = vpop.f32.mrb[0].mxu0
    %v176 = vpop.f32.mrb[0].mxu0
    %v177 = vpop.f32.mrb[0].mxu0
    %178 = vdwg.mxu0
    %v179 = vadd.f32 %v122, %v174
    %v180 = vxor.u32 %v179, 2147483648
    %v181 = vmul.f32 %v180, 1.442695
    %v182 = vpow.pop %v181
    %v183 = vadd.f32 %v182, 1.0
    %v184 = vrcp.pop %v183
    %v185 = vmul.f32 1.0, %v184
    %v186 = vtanh.pop %v179
    %v187 = vmul.f32 %v185, 0.0
    %189 = vrot.lane.b32.xlu0 %v186, 32
    %v190 = vpop.permute.xlu0 %189
    %v192 = vmul.f32 %v185, %v190
    %194 = vrot.lane.b32.xlu0 %v192, 32
    %v195 = vpop.permute.xlu0 %194
    %v197 = vadd.f32 %v187, %v195
    %v198 = vtanh.pop %v197
    %200 = vrot.lane.b32.xlu0 %v198, 32
    %v201 = vpop.permute.xlu0 %200
    %v203 = vmul.f32 %v185, %v201
    %205 = vrot.lane.b32.xlu0 %v203, 64
    %v206 = vpop.permute.xlu0 %205
    %vm208 = vcmask 254976
    %209 = vst.msk [vmem:[#allocation3] sm:$0x3] %vm208, %v206
    %v210 = vld [vmem:[#allocation2 + $0x2] sm:$0x3]
    %v211 = vpack.c.bf16 %v203, %v203
    %213 = vrot.lane.b32.xlu0 %v211, 64
    %v214 = vpop.permute.xlu0 %213
    %v216 = vsel %vm135, %v214, 0
    %218 = vmatprep.subr.bf16.mxu0 0
    %219 = vmatpush1.bf16.msra.mxu0 %v131
    %220 = vmatprep.subr.bf16.mxu0 0
    %221 = vmatpush1.bf16.msra.mxu0 %v132
    %222 = vmatprep.subr.bf16.mxu0 0
    %223 = vmatpush1.bf16.msra.mxu0 0
    %224 = vmatprep.subr.bf16.mxu0 0
    %225 = vmatpush1.bf16.msra.mxu0 0
    %226 = vmatprep.subr.bf16.mxu0 0
    %227 = vmatpush1.bf16.msra.mxu0 0
    %228 = vmatprep.subr.bf16.mxu0 0
    %229 = vmatpush1.bf16.msra.mxu0 0
    %230 = vmatprep.subr.bf16.mxu0 0
    %231 = vmatpush1.bf16.msra.mxu0 0
    %232 = vmatprep.subr.bf16.mxu0 0
    %233 = vmatpush1.bf16.msra.mxu0 0
    %234 = vmatprep.subr.bf16.mxu0 0
    %235 = vmatpush1.bf16.msra.mxu0 0
    %236 = vmatprep.subr.bf16.mxu0 0
    %237 = vmatpush1.bf16.msra.mxu0 0
    %238 = vmatprep.subr.bf16.mxu0 0
    %239 = vmatpush1.bf16.msra.mxu0 0
    %240 = vmatprep.subr.bf16.mxu0 0
    %241 = vmatpush1.bf16.msra.mxu0 0
    %242 = vmatprep.subr.bf16.mxu0 0
    %243 = vmatpush1.bf16.msra.mxu0 0
    %244 = vmatprep.subr.bf16.mxu0 0
    %245 = vmatpush1.bf16.msra.mxu0 0
    %246 = vmatprep.subr.bf16.mxu0 0
    %247 = vmatpush1.bf16.msra.mxu0 0
    %248 = vmatprep.subr.bf16.mxu0 0
    %249 = vmatpush1.bf16.msra.mxu0 0
    %250 = vmatprep.mubr.bf16.mxu0 0
    %251 = vmatmul.mubr.bf16.gmra.mrb[0].mxu0 %v216
    %v252 = vpop.f32.mrb[0].mxu0
    %v253 = vadd.f32 0.0, %v252
    %v254 = vpop.f32.mrb[0].mxu0
    %v255 = vpop.f32.mrb[0].mxu0
    %v256 = vpop.f32.mrb[0].mxu0
    %257 = vdwg.mxu0
    %v258 = vadd.f32 %v210, %v253
    %v259 = vxor.u32 %v258, 2147483648
    %v260 = vmul.f32 %v259, 1.442695
    %v261 = vpow.pop %v260
    %v262 = vadd.f32 %v261, 1.0
    %v263 = vrcp.pop %v262
    %v264 = vmul.f32 1.0, %v263
    %v265 = vtanh.pop %v258
    %v266 = vmul.f32 %v264, %v197
    %268 = vrot.lane.b32.xlu0 %v265, 32
    %v269 = vpop.permute.xlu0 %268
    %v271 = vmul.f32 %v264, %v269
    %273 = vrot.lane.b32.xlu0 %v271, 32
    %v274 = vpop.permute.xlu0 %273
    %v276 = vadd.f32 %v266, %v274
    %v277 = vtanh.pop %v276
    %279 = vrot.lane.b32.xlu0 %v277, 32
    %v280 = vpop.permute.xlu0 %279
    %v282 = vmul.f32 %v264, %v280
    %284 = vrot.lane.b32.xlu0 %v282, 64
    %v285 = vpop.permute.xlu0 %284
    %287 = vst.msk [vmem:[#allocation3 + $0x2] sm:$0x3] %vm208, %v285
    %v288 = vld [vmem:[#allocation2 + $0x4] sm:$0x3]
    %v289 = vpack.c.bf16 %v282, %v282
    %291 = vrot.lane.b32.xlu0 %v289, 64
    %v292 = vpop.permute.xlu0 %291
    %v294 = vsel %vm135, %v292, 0
    %296 = vmatprep.subr.bf16.mxu0 0
    %297 = vmatpush1.bf16.msra.mxu0 %v131
    %298 = vmatprep.subr.bf16.mxu0 0
    %299 = vmatpush1.bf16.msra.mxu0 %v132
    %300 = vmatprep.subr.bf16.mxu0 0
    %301 = vmatpush1.bf16.msra.mxu0 0
    %302 = vmatprep.subr.bf16.mxu0 0
    %303 = vmatpush1.bf16.msra.mxu0 0
    %304 = vmatprep.subr.bf16.mxu0 0
    %305 = vmatpush1.bf16.msra.mxu0 0
    %306 = vmatprep.subr.bf16.mxu0 0
    %307 = vmatpush1.bf16.msra.mxu0 0
    %308 = vmatprep.subr.bf16.mxu0 0
    %309 = vmatpush1.bf16.msra.mxu0 0
    %310 = vmatprep.subr.bf16.mxu0 0
    %311 = vmatpush1.bf16.msra.mxu0 0
    %312 = vmatprep.subr.bf16.mxu0 0
    %313 = vmatpush1.bf16.msra.mxu0 0
    %314 = vmatprep.subr.bf16.mxu0 0
    %315 = vmatpush1.bf16.msra.mxu0 0
    %316 = vmatprep.subr.bf16.mxu0 0
    %317 = vmatpush1.bf16.msra.mxu0 0
    %318 = vmatprep.subr.bf16.mxu0 0
    %319 = vmatpush1.bf16.msra.mxu0 0
    %320 = vmatprep.subr.bf16.mxu0 0
    %321 = vmatpush1.bf16.msra.mxu0 0
    %322 = vmatprep.subr.bf16.mxu0 0
    %323 = vmatpush1.bf16.msra.mxu0 0
    %324 = vmatprep.subr.bf16.mxu0 0
    %325 = vmatpush1.bf16.msra.mxu0 0
    %326 = vmatprep.subr.bf16.mxu0 0
    %327 = vmatpush1.bf16.msra.mxu0 0
    %328 = vmatprep.mubr.bf16.mxu0 0
    %329 = vmatmul.mubr.bf16.gmra.mrb[0].mxu0 %v294
    %v330 = vpop.f32.mrb[0].mxu0
    %v331 = vadd.f32 0.0, %v330
    %v332 = vpop.f32.mrb[0].mxu0
    %v333 = vpop.f32.mrb[0].mxu0
    %v334 = vpop.f32.mrb[0].mxu0
    %335 = vdwg.mxu0
    %v336 = vadd.f32 %v288, %v331
    %v337 = vxor.u32 %v336, 2147483648
    %v338 = vmul.f32 %v337, 1.442695
    %v339 = vpow.pop %v338
    %v340 = vadd.f32 %v339, 1.0
    %v341 = vrcp.pop %v340
    %v342 = vmul.f32 1.0, %v341
    %v343 = vtanh.pop %v336
    %v344 = vmul.f32 %v342, %v276
    %346 = vrot.lane.b32.xlu0 %v343, 32
    %v347 = vpop.permute.xlu0 %346
    %v349 = vmul.f32 %v342, %v347
    %351 = vrot.lane.b32.xlu0 %v349, 32
    %v352 = vpop.permute.xlu0 %351
    %v354 = vadd.f32 %v344, %v352
    %v355 = vtanh.pop %v354
    %357 = vrot.lane.b32.xlu0 %v355, 32
    %v358 = vpop.permute.xlu0 %357
    %v360 = vmul.f32 %v342, %v358
    %362 = vrot.lane.b32.xlu0 %v360, 64
    %v363 = vpop.permute.xlu0 %362
    %365 = vst.msk [vmem:[#allocation3 + $0x4] sm:$0x3] %vm208, %v363
    %v366 = vld [vmem:[#allocation2 + $0x6] sm:$0x3]
    %v367 = vpack.c.bf16 %v360, %v360
    %369 = vrot.lane.b32.xlu0 %v367, 64
    %v370 = vpop.permute.xlu0 %369
    %v372 = vsel %vm135, %v370, 0
    %374 = vmatprep.subr.bf16.mxu0 0
    %375 = vmatpush1.bf16.msra.mxu0 %v131
    %376 = vmatprep.subr.bf16.mxu0 0
    %377 = vmatpush1.bf16.msra.mxu0 %v132
    %378 = vmatprep.subr.bf16.mxu0 0
    %379 = vmatpush1.bf16.msra.mxu0 0
    %380 = vmatprep.subr.bf16.mxu0 0
    %381 = vmatpush1.bf16.msra.mxu0 0
    %382 = vmatprep.subr.bf16.mxu0 0
    %383 = vmatpush1.bf16.msra.mxu0 0
    %384 = vmatprep.subr.bf16.mxu0 0
    %385 = vmatpush1.bf16.msra.mxu0 0
    %386 = vmatprep.subr.bf16.mxu0 0
    %387 = vmatpush1.bf16.msra.mxu0 0
    %388 = vmatprep.subr.bf16.mxu0 0
    %389 = vmatpush1.bf16.msra.mxu0 0
    %390 = vmatprep.subr.bf16.mxu0 0
    %391 = vmatpush1.bf16.msra.mxu0 0
    %392 = vmatprep.subr.bf16.mxu0 0
    %393 = vmatpush1.bf16.msra.mxu0 0
    %394 = vmatprep.subr.bf16.mxu0 0
    %395 = vmatpush1.bf16.msra.mxu0 0
    %396 = vmatprep.subr.bf16.mxu0 0
    %397 = vmatpush1.bf16.msra.mxu0 0
    %398 = vmatprep.subr.bf16.mxu0 0
    %399 = vmatpush1.bf16.msra.mxu0 0
    %400 = vmatprep.subr.bf16.mxu0 0
    %401 = vmatpush1.bf16.msra.mxu0 0
    %402 = vmatprep.subr.bf16.mxu0 0
    %403 = vmatpush1.bf16.msra.mxu0 0
    %404 = vmatprep.subr.bf16.mxu0 0
    %405 = vmatpush1.bf16.msra.mxu0 0
    %406 = vmatprep.mubr.bf16.mxu0 0
    %407 = vmatmul.mubr.bf16.gmra.mrb[0].mxu0 %v372
    %v408 = vpop.f32.mrb[0].mxu0
    %v409 = vadd.f32 0.0, %v408
    %v410 = vpop.f32.mrb[0].mxu0
    %v411 = vpop.f32.mrb[0].mxu0
    %v412 = vpop.f32.mrb[0].mxu0
    %413 = vdwg.mxu0
    %v414 = vadd.f32 %v366, %v409
    %v415 = vxor.u32 %v414, 2147483648
    %v416 = vmul.f32 %v415, 1.442695
    %v417 = vpow.pop %v416
    %v418 = vadd.f32 %v417, 1.0
    %v419 = vrcp.pop %v418
    %v420 = vmul.f32 1.0, %v419
    %v421 = vtanh.pop %v414
    %v422 = vmul.f32 %v420, %v354
    %424 = vrot.lane.b32.xlu0 %v421, 32
    %v425 = vpop.permute.xlu0 %424
    %v427 = vmul.f32 %v420, %v425
    %429 = vrot.lane.b32.xlu0 %v427, 32
    %v430 = vpop.permute.xlu0 %429
    %v432 = vadd.f32 %v422, %v430
    %v433 = vtanh.pop %v432
    %435 = vrot.lane.b32.xlu0 %v433, 32
    %v436 = vpop.permute.xlu0 %435
    %v438 = vmul.f32 %v420, %v436
    %440 = vrot.lane.b32.xlu0 %v438, 64
    %v441 = vpop.permute.xlu0 %440
    %443 = vst.msk [vmem:[#allocation3 + $0x6] sm:$0x3] %vm208, %v441
    %v444 = vld [vmem:[#allocation2 + $0x8] sm:$0x3]
    %v445 = vpack.c.bf16 %v438, %v438
    %447 = vrot.lane.b32.xlu0 %v445, 64
    %v448 = vpop.permute.xlu0 %447
    %v450 = vsel %vm135, %v448, 0
    %452 = vmatprep.subr.bf16.mxu0 0
    %453 = vmatpush1.bf16.msra.mxu0 %v131
    %454 = vmatprep.subr.bf16.mxu0 0
    %455 = vmatpush1.bf16.msra.mxu0 %v132
    %456 = vmatprep.subr.bf16.mxu0 0
    %457 = vmatpush1.bf16.msra.mxu0 0
    %458 = vmatprep.subr.bf16.mxu0 0
    %459 = vmatpush1.bf16.msra.mxu0 0
    %460 = vmatprep.subr.bf16.mxu0 0
    %461 = vmatpush1.bf16.msra.mxu0 0
    %462 = vmatprep.subr.bf16.mxu0 0
    %463 = vmatpush1.bf16.msra.mxu0 0
    %464 = vmatprep.subr.bf16.mxu0 0
    %465 = vmatpush1.bf16.msra.mxu0 0
    %466 = vmatprep.subr.bf16.mxu0 0
    %467 = vmatpush1.bf16.msra.mxu0 0
    %468 = vmatprep.subr.bf16.mxu0 0
    %469 = vmatpush1.bf16.msra.mxu0 0
    %470 = vmatprep.subr.bf16.mxu0 0
    %471 = vmatpush1.bf16.msra.mxu0 0
    %472 = vmatprep.subr.bf16.mxu0 0
    %473 = vmatpush1.bf16.msra.mxu0 0
    %474 = vmatprep.subr.bf16.mxu0 0
    %475 = vmatpush1.bf16.msra.mxu0 0
    %476 = vmatprep.subr.bf16.mxu0 0
    %477 = vmatpush1.bf16.msra.mxu0 0
    %478 = vmatprep.subr.bf16.mxu0 0
    %479 = vmatpush1.bf16.msra.mxu0 0
    %480 = vmatprep.subr.bf16.mxu0 0
    %481 = vmatpush1.bf16.msra.mxu0 0
    %482 = vmatprep.subr.bf16.mxu0 0
    %483 = vmatpush1.bf16.msra.mxu0 0
    %484 = vmatprep.mubr.bf16.mxu0 0
    %485 = vmatmul.mubr.bf16.gmra.mrb[0].mxu0 %v450
    %v486 = vpop.f32.mrb[0].mxu0
    %v487 = vadd.f32 0.0, %v486
    %v488 = vpop.f32.mrb[0].mxu0
    %v489 = vpop.f32.mrb[0].mxu0
    %v490 = vpop.f32.mrb[0].mxu0
    %491 = vdwg.mxu0
    %v492 = vadd.f32 %v444, %v487
    %v493 = vxor.u32 %v492, 2147483648
    %v494 = vmul.f32 %v493, 1.442695
    %v495 = vpow.pop %v494
    %v496 = vadd.f32 %v495, 1.0
    %v497 = vrcp.pop %v496
    %v498 = vmul.f32 1.0, %v497
    %v499 = vtanh.pop %v492
    %v500 = vmul.f32 %v498, %v432
    %502 = vrot.lane.b32.xlu0 %v499, 32
    %v503 = vpop.permute.xlu0 %502
    %v505 = vmul.f32 %v498, %v503
    %507 = vrot.lane.b32.xlu0 %v505, 32
    %v508 = vpop.permute.xlu0 %507
    %v510 = vadd.f32 %v500, %v508
    %v511 = vtanh.pop %v510
    %513 = vrot.lane.b32.xlu0 %v511, 32
    %v514 = vpop.permute.xlu0 %513
    %v516 = vmul.f32 %v498, %v514
    %518 = vrot.lane.b32.xlu0 %v516, 64
    %v519 = vpop.permute.xlu0 %518
    %521 = vst.msk [vmem:[#allocation3 + $0x8] sm:$0x3] %vm208, %v519
    %v522 = vld [vmem:[#allocation2 + $0xa] sm:$0x3]
    %v523 = vpack.c.bf16 %v516, %v516
    %525 = vrot.lane.b32.xlu0 %v523, 64
    %v526 = vpop.permute.xlu0 %525
    %v528 = vsel %vm135, %v526, 0
    %530 = vmatprep.subr.bf16.mxu0 0
    %531 = vmatpush1.bf16.msra.mxu0 %v131
    %532 = vmatprep.subr.bf16.mxu0 0
    %533 = vmatpush1.bf16.msra.mxu0 %v132
    %534 = vmatprep.subr.bf16.mxu0 0
    %535 = vmatpush1.bf16.msra.mxu0 0
    %536 = vmatprep.subr.bf16.mxu0 0
    %537 = vmatpush1.bf16.msra.mxu0 0
    %538 = vmatprep.subr.bf16.mxu0 0
    %539 = vmatpush1.bf16.msra.mxu0 0
    %540 = vmatprep.subr.bf16.mxu0 0
    %541 = vmatpush1.bf16.msra.mxu0 0
    %542 = vmatprep.subr.bf16.mxu0 0
    %543 = vmatpush1.bf16.msra.mxu0 0
    %544 = vmatprep.subr.bf16.mxu0 0
    %545 = vmatpush1.bf16.msra.mxu0 0
    %546 = vmatprep.subr.bf16.mxu0 0
    %547 = vmatpush1.bf16.msra.mxu0 0
    %548 = vmatprep.subr.bf16.mxu0 0
    %549 = vmatpush1.bf16.msra.mxu0 0
    %550 = vmatprep.subr.bf16.mxu0 0
    %551 = vmatpush1.bf16.msra.mxu0 0
    %552 = vmatprep.subr.bf16.mxu0 0
    %553 = vmatpush1.bf16.msra.mxu0 0
    %554 = vmatprep.subr.bf16.mxu0 0
    %555 = vmatpush1.bf16.msra.mxu0 0
    %556 = vmatprep.subr.bf16.mxu0 0
    %557 = vmatpush1.bf16.msra.mxu0 0
    %558 = vmatprep.subr.bf16.mxu0 0
    %559 = vmatpush1.bf16.msra.mxu0 0
    %560 = vmatprep.subr.bf16.mxu0 0
    %561 = vmatpush1.bf16.msra.mxu0 0
    %562 = vmatprep.mubr.bf16.mxu0 0
    %563 = vmatmul.mubr.bf16.gmra.mrb[0].mxu0 %v528
    %v564 = vpop.f32.mrb[0].mxu0
    %v565 = vadd.f32 0.0, %v564
    %v566 = vpop.f32.mrb[0].mxu0
    %v567 = vpop.f32.mrb[0].mxu0
    %v568 = vpop.f32.mrb[0].mxu0
    %569 = vdwg.mxu0
    %v570 = vadd.f32 %v522, %v565
    %v571 = vxor.u32 %v570, 2147483648
    %v572 = vmul.f32 %v571, 1.442695
    %v573 = vpow.pop %v572
    %v574 = vadd.f32 %v573, 1.0
    %v575 = vrcp.pop %v574
    %v576 = vmul.f32 1.0, %v575
    %v577 = vtanh.pop %v570
    %v578 = vmul.f32 %v576, %v510
    %580 = vrot.lane.b32.xlu0 %v577, 32
    %v581 = vpop.permute.xlu0 %580
    %v583 = vmul.f32 %v576, %v581
    %585 = vrot.lane.b32.xlu0 %v583, 32
    %v586 = vpop.permute.xlu0 %585
    %v588 = vadd.f32 %v578, %v586
    %v589 = vtanh.pop %v588
    %591 = vrot.lane.b32.xlu0 %v589, 32
    %v592 = vpop.permute.xlu0 %591
    %v594 = vmul.f32 %v576, %v592
    %596 = vrot.lane.b32.xlu0 %v594, 64
    %v597 = vpop.permute.xlu0 %596
    %599 = vst.msk [vmem:[#allocation3 + $0xa] sm:$0x3] %vm208, %v597
    %v600 = vld [vmem:[#allocation2 + $0xc] sm:$0x3]
    %v601 = vpack.c.bf16 %v594, %v594
    %603 = vrot.lane.b32.xlu0 %v601, 64
    %v604 = vpop.permute.xlu0 %603
    %v606 = vsel %vm135, %v604, 0
    %608 = vmatprep.subr.bf16.mxu0 0
    %609 = vmatpush1.bf16.msra.mxu0 %v131
    %610 = vmatprep.subr.bf16.mxu0 0
    %611 = vmatpush1.bf16.msra.mxu0 %v132
    %612 = vmatprep.subr.bf16.mxu0 0
    %613 = vmatpush1.bf16.msra.mxu0 0
    %614 = vmatprep.subr.bf16.mxu0 0
    %615 = vmatpush1.bf16.msra.mxu0 0
    %616 = vmatprep.subr.bf16.mxu0 0
    %617 = vmatpush1.bf16.msra.mxu0 0
    %618 = vmatprep.subr.bf16.mxu0 0
    %619 = vmatpush1.bf16.msra.mxu0 0
    %620 = vmatprep.subr.bf16.mxu0 0
    %621 = vmatpush1.bf16.msra.mxu0 0
    %622 = vmatprep.subr.bf16.mxu0 0
    %623 = vmatpush1.bf16.msra.mxu0 0
    %624 = vmatprep.subr.bf16.mxu0 0
    %625 = vmatpush1.bf16.msra.mxu0 0
    %626 = vmatprep.subr.bf16.mxu0 0
    %627 = vmatpush1.bf16.msra.mxu0 0
    %628 = vmatprep.subr.bf16.mxu0 0
    %629 = vmatpush1.bf16.msra.mxu0 0
    %630 = vmatprep.subr.bf16.mxu0 0
    %631 = vmatpush1.bf16.msra.mxu0 0
    %632 = vmatprep.subr.bf16.mxu0 0
    %633 = vmatpush1.bf16.msra.mxu0 0
    %634 = vmatprep.subr.bf16.mxu0 0
    %635 = vmatpush1.bf16.msra.mxu0 0
    %636 = vmatprep.subr.bf16.mxu0 0
    %637 = vmatpush1.bf16.msra.mxu0 0
    %638 = vmatprep.subr.bf16.mxu0 0
    %639 = vmatpush1.bf16.msra.mxu0 0
    %640 = vmatprep.mubr.bf16.mxu0 0
    %641 = vmatmul.mubr.bf16.gmra.mrb[0].mxu0 %v606
    %v642 = vpop.f32.mrb[0].mxu0
    %v643 = vadd.f32 0.0, %v642
    %v644 = vpop.f32.mrb[0].mxu0
    %v645 = vpop.f32.mrb[0].mxu0
    %v646 = vpop.f32.mrb[0].mxu0
    %647 = vdwg.mxu0
    %v648 = vadd.f32 %v600, %v643
    %v649 = vxor.u32 %v648, 2147483648
    %v650 = vmul.f32 %v649, 1.442695
    %v651 = vpow.pop %v650
    %v652 = vadd.f32 %v651, 1.0
    %v653 = vrcp.pop %v652
    %v654 = vmul.f32 1.0, %v653
    %v655 = vtanh.pop %v648
    %v656 = vmul.f32 %v654, %v588
    %658 = vrot.lane.b32.xlu0 %v655, 32
    %v659 = vpop.permute.xlu0 %658
    %v661 = vmul.f32 %v654, %v659
    %663 = vrot.lane.b32.xlu0 %v661, 32
    %v664 = vpop.permute.xlu0 %663
    %v666 = vadd.f32 %v656, %v664
    %v667 = vtanh.pop %v666
    %669 = vrot.lane.b32.xlu0 %v667, 32
    %v670 = vpop.permute.xlu0 %669
    %v672 = vmul.f32 %v654, %v670
    %674 = vrot.lane.b32.xlu0 %v672, 64
    %v675 = vpop.permute.xlu0 %674
    %677 = vst.msk [vmem:[#allocation3 + $0xc] sm:$0x3] %vm208, %v675
    %v678 = vld [vmem:[#allocation2 + $0xe] sm:$0x3]
    %v679 = vpack.c.bf16 %v672, %v672
    %681 = vrot.lane.b32.xlu0 %v679, 64
    %v682 = vpop.permute.xlu0 %681
    %v684 = vsel %vm135, %v682, 0
    %686 = vmatprep.subr.bf16.mxu0 0
    %687 = vmatpush1.bf16.msra.mxu0 %v131
    %688 = vmatprep.subr.bf16.mxu0 0
    %689 = vmatpush1.bf16.msra.mxu0 %v132
    %690 = vmatprep.subr.bf16.mxu0 0
    %691 = vmatpush1.bf16.msra.mxu0 0
    %692 = vmatprep.subr.bf16.mxu0 0
    %693 = vmatpush1.bf16.msra.mxu0 0
    %694 = vmatprep.subr.bf16.mxu0 0
    %695 = vmatpush1.bf16.msra.mxu0 0
    %696 = vmatprep.subr.bf16.mxu0 0
    %697 = vmatpush1.bf16.msra.mxu0 0
    %698 = vmatprep.subr.bf16.mxu0 0
    %699 = vmatpush1.bf16.msra.mxu0 0
    %700 = vmatprep.subr.bf16.mxu0 0
    %701 = vmatpush1.bf16.msra.mxu0 0
    %702 = vmatprep.subr.bf16.mxu0 0
    %703 = vmatpush1.bf16.msra.mxu0 0
    %704 = vmatprep.subr.bf16.mxu0 0
    %705 = vmatpush1.bf16.msra.mxu0 0
    %706 = vmatprep.subr.bf16.mxu0 0
    %707 = vmatpush1.bf16.msra.mxu0 0
    %708 = vmatprep.subr.bf16.mxu0 0
    %709 = vmatpush1.bf16.msra.mxu0 0
    %710 = vmatprep.subr.bf16.mxu0 0
    %711 = vmatpush1.bf16.msra.mxu0 0
    %712 = vmatprep.subr.bf16.mxu0 0
    %713 = vmatpush1.bf16.msra.mxu0 0
    %714 = vmatprep.subr.bf16.mxu0 0
    %715 = vmatpush1.bf16.msra.mxu0 0
    %716 = vmatprep.subr.bf16.mxu0 0
    %717 = vmatpush1.bf16.msra.mxu0 0
    %718 = vmatprep.mubr.bf16.mxu0 0
    %719 = vmatmul.mubr.bf16.gmra.mrb[0].mxu0 %v684
    %v720 = vpop.f32.mrb[0].mxu0
    %v721 = vadd.f32 0.0, %v720
    %v722 = vpop.f32.mrb[0].mxu0
    %v723 = vpop.f32.mrb[0].mxu0
    %v724 = vpop.f32.mrb[0].mxu0
    %725 = vdwg.mxu0
    %v726 = vadd.f32 %v678, %v721
    %v727 = vxor.u32 %v726, 2147483648
    %v728 = vmul.f32 %v727, 1.442695
    %v729 = vpow.pop %v728
    %v730 = vadd.f32 %v729, 1.0
    %v731 = vrcp.pop %v730
    %v732 = vmul.f32 1.0, %v731
    %v733 = vtanh.pop %v726
    %v734 = vmul.f32 %v732, %v666
    %736 = vrot.lane.b32.xlu0 %v733, 32
    %v737 = vpop.permute.xlu0 %736
    %v739 = vmul.f32 %v732, %v737
    %741 = vrot.lane.b32.xlu0 %v739, 32
    %v742 = vpop.permute.xlu0 %741
    %v744 = vadd.f32 %v734, %v742
    %v745 = vtanh.pop %v744
    %747 = vrot.lane.b32.xlu0 %v745, 32
    %v748 = vpop.permute.xlu0 %747
    %v750 = vmul.f32 %v732, %v748
    %752 = vrot.lane.b32.xlu0 %v750, 64
    %v753 = vpop.permute.xlu0 %752
    %755 = vst.msk [vmem:[#allocation3 + $0xe] sm:$0x3] %vm208, %v753
    %v756 = vld [vmem:[#allocation3] sm:$0xff]
    %v757 = vld [vmem:[#allocation3 + $0x8] sm:$0xff]
    %v758 = vpack.c.bf16 %v757, %v756
    %s759 = scalar_lea.vmem [#allocation8], 48
    %v760 = vld [vmem:[%s759] sm:$0xf]
    %v761 = vld [vmem:[%s759 + $0x4] sm:$0xf]
    %v762 = vld [vmem:[%s759 + $0x8] sm:$0xf]
    %v763 = vld [vmem:[%s759 + $0xc] sm:$0xf]
    %v768 = vunpack.c.l.b16 %v760
    %v769 = vunpack.c.l.b16 %v761
    %v770 = vunpack.c.l.b16 %v762
    %v771 = vunpack.c.l.b16 %v763
    %v772 = vpack.c.b16 %v769, %v768
    %v773 = vpack.c.b16 %v771, %v770
    %v777 = vsel %vm135, %v758, 0
    %779 = vmatprep.subr.bf16.mxu0 0
    %780 = vmatpush1.bf16.msra.mxu0 %v772
    %781 = vmatprep.subr.bf16.mxu0 0
    %782 = vmatpush1.bf16.msra.mxu0 %v773
    %783 = vmatprep.subr.bf16.mxu0 0
    %784 = vmatpush1.bf16.msra.mxu0 0
    %785 = vmatprep.subr.bf16.mxu0 0
    %786 = vmatpush1.bf16.msra.mxu0 0
    %787 = vmatprep.subr.bf16.mxu0 0
    %788 = vmatpush1.bf16.msra.mxu0 0
    %789 = vmatprep.subr.bf16.mxu0 0
    %790 = vmatpush1.bf16.msra.mxu0 0
    %791 = vmatprep.subr.bf16.mxu0 0
    %792 = vmatpush1.bf16.msra.mxu0 0
    %793 = vmatprep.subr.bf16.mxu0 0
    %794 = vmatpush1.bf16.msra.mxu0 0
    %795 = vmatprep.subr.bf16.mxu0 0
    %796 = vmatpush1.bf16.msra.mxu0 0
    %797 = vmatprep.subr.bf16.mxu0 0
    %798 = vmatpush1.bf16.msra.mxu0 0
    %799 = vmatprep.subr.bf16.mxu0 0
    %800 = vmatpush1.bf16.msra.mxu0 0
    %801 = vmatprep.subr.bf16.mxu0 0
    %802 = vmatpush1.bf16.msra.mxu0 0
    %803 = vmatprep.subr.bf16.mxu0 0
    %804 = vmatpush1.bf16.msra.mxu0 0
    %805 = vmatprep.subr.bf16.mxu0 0
    %806 = vmatpush1.bf16.msra.mxu0 0
    %807 = vmatprep.subr.bf16.mxu0 0
    %808 = vmatpush1.bf16.msra.mxu0 0
    %809 = vmatprep.subr.bf16.mxu0 0
    %810 = vmatpush1.bf16.msra.mxu0 0
    %811 = vmatprep.mubr.bf16.mxu0 0
    %812 = vmatmul.mubr.bf16.gmra.mrb[0].mxu0 %v777
    %v813 = vpop.f32.mrb[0].mxu0
    %v814 = vadd.f32 0.0, %v813
    %v815 = vpop.f32.mrb[0].mxu0
    %v816 = vpop.f32.mrb[0].mxu0
    %v817 = vadd.f32 0.0, %v816
    %v818 = vpop.f32.mrb[0].mxu0
    %819 = vdwg.mxu0
    %v820 = vld [vmem:[#allocation7 + $0x11] sm:$0x1]
    %v821 = vlaneseq
    %v822 = vshrl.u32 %v821, 7
    %v823 = vsub.s32 0, %v822
    %v824 = vrot.slane %v820, %v823
    %v825 = vadd.f32 %v814, %v824
    %v826 = vadd.f32 %v817, %v824
    %v827 = vsel %vm135, %v825, 0.0
    %828 = vadd.xlane.f32.xlu0 %v827
    %v829 = vpop.xlane.xlu0 %828
    %v830 = vsel %vm135, %v826, 0.0
    %831 = vadd.xlane.f32.xlu0 %v830
    %v832 = vpop.xlane.xlu0 %831
    %v833 = vrcp.pop 32.0
    %v834 = vmul.f32 %v829, %v833
    %v835 = vmul.f32 %v832, %v833
    %v836 = vsub.f32 %v825, %v834
    %v837 = vsub.f32 %v826, %v835
    %v838 = vmul.f32 %v836, %v836
    %v839 = vmul.f32 %v837, %v837
    %v840 = vsel %vm135, %v838, 0.0
    %841 = vadd.xlane.f32.xlu0 %v840
    %v842 = vpop.xlane.xlu0 %841
    %v843 = vsel %vm135, %v839, 0.0
    %844 = vadd.xlane.f32.xlu0 %v843
    %v845 = vpop.xlane.xlu0 %844
    %v846 = vmul.f32 %v842, %v833
    %v847 = vmul.f32 %v845, %v833
    %v848 = vadd.f32 %v846, 1e-05
    %v849 = vadd.f32 %v847, 1e-05
    %v850 = vrsqrt.pop %v848
    %v851 = vrsqrt.pop %v849
    %v852 = vmul.f32 %v836, %v850
    %v853 = vmul.f32 %v837, %v851
    %v854 = vpack.c.bf16 %v853, %v852
    %s855 = scalar_lea.vmem [#allocation8], 16
    %v856 = vld [vmem:[%s855] sm:$0xf]
    %v857 = vld [vmem:[%s855 + $0x4] sm:$0xf]
    %v858 = vld [vmem:[%s855 + $0x8] sm:$0xf]
    %v859 = vld [vmem:[%s855 + $0xc] sm:$0xf]
    %v860 = vld [vmem:[#allocation7 + $0x10] sm:$0x1]
    %v861 = vlaneseq
    %v862 = vshrl.u32 %v861, 7
    %v863 = vsub.s32 0, %v862
    %v864 = vrot.slane %v860, %v863
    %v869 = vunpack.c.l.b16 %v856
    %v870 = vunpack.c.l.b16 %v857
    %v871 = vunpack.c.l.b16 %v858
    %v872 = vunpack.c.l.b16 %v859
    %v873 = vpack.c.b16 %v870, %v869
    %v874 = vpack.c.b16 %v872, %v871
    %v878 = vsel %vm135, %v854, 0
    %880 = vmatprep.subr.bf16.mxu0 0
    %881 = vmatpush1.bf16.msra.mxu0 %v873
    %882 = vmatprep.subr.bf16.mxu0 0
    %883 = vmatpush1.bf16.msra.mxu0 %v874
    %884 = vmatprep.subr.bf16.mxu0 0
    %885 = vmatpush1.bf16.msra.mxu0 0
    %886 = vmatprep.subr.bf16.mxu0 0
    %887 = vmatpush1.bf16.msra.mxu0 0
    %888 = vmatprep.subr.bf16.mxu0 0
    %889 = vmatpush1.bf16.msra.mxu0 0
    %890 = vmatprep.subr.bf16.mxu0 0
    %891 = vmatpush1.bf16.msra.mxu0 0
    %892 = vmatprep.subr.bf16.mxu0 0
    %893 = vmatpush1.bf16.msra.mxu0 0
    %894 = vmatprep.subr.bf16.mxu0 0
    %895 = vmatpush1.bf16.msra.mxu0 0
    %896 = vmatprep.subr.bf16.mxu0 0
    %897 = vmatpush1.bf16.msra.mxu0 0
    %898 = vmatprep.subr.bf16.mxu0 0
    %899 = vmatpush1.bf16.msra.mxu0 0
    %900 = vmatprep.subr.bf16.mxu0 0
    %901 = vmatpush1.bf16.msra.mxu0 0
    %902 = vmatprep.subr.bf16.mxu0 0
    %903 = vmatpush1.bf16.msra.mxu0 0
    %904 = vmatprep.subr.bf16.mxu0 0
    %905 = vmatpush1.bf16.msra.mxu0 0
    %906 = vmatprep.subr.bf16.mxu0 0
    %907 = vmatpush1.bf16.msra.mxu0 0
    %908 = vmatprep.subr.bf16.mxu0 0
    %909 = vmatpush1.bf16.msra.mxu0 0
    %910 = vmatprep.subr.bf16.mxu0 0
    %911 = vmatpush1.bf16.msra.mxu0 0
    %912 = vmatprep.mubr.bf16.mxu0 0
    %913 = vmatmul.mubr.bf16.gmra.mrb[0].mxu0 %v878
    %v914 = vpop.f32.mrb[0].mxu0
    %v915 = vadd.f32 %v864, %v914
    %v916 = vpop.f32.mrb[0].mxu0
    %v917 = vpop.f32.mrb[0].mxu0
    %v918 = vadd.f32 %v864, %v917
    %v919 = vpop.f32.mrb[0].mxu0
    %920 = vdwg.mxu0
    %921 = vst [vmem:[#allocation2] sm:$0xff] %v915
    %922 = vst [vmem:[#allocation2 + $0x8] sm:$0xff] %v918
    %s923 = scalar_lea.vmem [#allocation8], 32
    %v924 = vld [vmem:[%s923] sm:$0xf]
    %v925 = vld [vmem:[%s923 + $0x4] sm:$0xf]
    %v926 = vld [vmem:[%s923 + $0x8] sm:$0xf]
    %v927 = vld [vmem:[%s923 + $0xc] sm:$0xf]
    %v928 = vld [vmem:[#allocation2] sm:$0x3]
    %v933 = vunpack.c.l.b16 %v924
    %v934 = vunpack.c.l.b16 %v925
    %v935 = vunpack.c.l.b16 %v926
    %v936 = vunpack.c.l.b16 %v927
    %v937 = vpack.c.b16 %v934, %v933
    %v938 = vpack.c.b16 %v936, %v935
    %941 = vmatprep.subr.bf16.mxu0 0
    %942 = vmatpush1.bf16.msra.mxu0 %v937
    %943 = vmatprep.subr.bf16.mxu0 0
    %944 = vmatpush1.bf16.msra.mxu0 %v938
    %945 = vmatprep.subr.bf16.mxu0 0
    %946 = vmatpush1.bf16.msra.mxu0 0
    %947 = vmatprep.subr.bf16.mxu0 0
    %948 = vmatpush1.bf16.msra.mxu0 0
    %949 = vmatprep.subr.bf16.mxu0 0
    %950 = vmatpush1.bf16.msra.mxu0 0
    %951 = vmatprep.subr.bf16.mxu0 0
    %952 = vmatpush1.bf16.msra.mxu0 0
    %953 = vmatprep.subr.bf16.mxu0 0
    %954 = vmatpush1.bf16.msra.mxu0 0
    %955 = vmatprep.subr.bf16.mxu0 0
    %956 = vmatpush1.bf16.msra.mxu0 0
    %957 = vmatprep.subr.bf16.mxu0 0
    %958 = vmatpush1.bf16.msra.mxu0 0
    %959 = vmatprep.subr.bf16.mxu0 0
    %960 = vmatpush1.bf16.msra.mxu0 0
    %961 = vmatprep.subr.bf16.mxu0 0
    %962 = vmatpush1.bf16.msra.mxu0 0
    %963 = vmatprep.subr.bf16.mxu0 0
    %964 = vmatpush1.bf16.msra.mxu0 0
    %965 = vmatprep.subr.bf16.mxu0 0
    %966 = vmatpush1.bf16.msra.mxu0 0
    %967 = vmatprep.subr.bf16.mxu0 0
    %968 = vmatpush1.bf16.msra.mxu0 0
    %969 = vmatprep.subr.bf16.mxu0 0
    %970 = vmatpush1.bf16.msra.mxu0 0
    %971 = vmatprep.subr.bf16.mxu0 0
    %972 = vmatpush1.bf16.msra.mxu0 0
    %973 = vmatprep.mubr.bf16.mxu0 0
    %974 = vmatmul.mubr.bf16.gmra.mrb[0].mxu0 %v137
    %v975 = vpop.f32.mrb[0].mxu0
    %v976 = vadd.f32 0.0, %v975
    %v977 = vpop.f32.mrb[0].mxu0
    %v978 = vpop.f32.mrb[0].mxu0
    %v979 = vpop.f32.mrb[0].mxu0
    %980 = vdwg.mxu0
    %v981 = vadd.f32 %v928, %v976
    %v982 = vxor.u32 %v981, 2147483648
    %v983 = vmul.f32 %v982, 1.442695
    %v984 = vpow.pop %v983
    %v985 = vadd.f32 %v984, 1.0
    %v986 = vrcp.pop %v985
    %v987 = vmul.f32 1.0, %v986
    %v988 = vtanh.pop %v981
    %v989 = vmul.f32 %v987, 0.0
    %991 = vrot.lane.b32.xlu0 %v988, 32
    %v992 = vpop.permute.xlu0 %991
    %v994 = vmul.f32 %v987, %v992
    %996 = vrot.lane.b32.xlu0 %v994, 32
    %v997 = vpop.permute.xlu0 %996
    %v999 = vadd.f32 %v989, %v997
    %v1000 = vtanh.pop %v999
    %1002 = vrot.lane.b32.xlu0 %v1000, 32
    %v1003 = vpop.permute.xlu0 %1002
    %v1005 = vmul.f32 %v987, %v1003
    %1007 = vrot.lane.b32.xlu0 %v1005, 64
    %v1008 = vpop.permute.xlu0 %1007
    %1010 = vst.msk [vmem:[#allocation3] sm:$0x3] %vm208, %v1008
    %v1011 = vld [vmem:[#allocation2 + $0x2] sm:$0x3]
    %v1012 = vpack.c.bf16 %v1005, %v1005
    %1014 = vrot.lane.b32.xlu0 %v1012, 64
    %v1015 = vpop.permute.xlu0 %1014
    %v1017 = vsel %vm135, %v1015, 0
    %1019 = vmatprep.subr.bf16.mxu0 0
    %1020 = vmatpush1.bf16.msra.mxu0 %v937
    %1021 = vmatprep.subr.bf16.mxu0 0
    %1022 = vmatpush1.bf16.msra.mxu0 %v938
    %1023 = vmatprep.subr.bf16.mxu0 0
    %1024 = vmatpush1.bf16.msra.mxu0 0
    %1025 = vmatprep.subr.bf16.mxu0 0
    %1026 = vmatpush1.bf16.msra.mxu0 0
    %1027 = vmatprep.subr.bf16.mxu0 0
    %1028 = vmatpush1.bf16.msra.mxu0 0
    %1029 = vmatprep.subr.bf16.mxu0 0
    %1030 = vmatpush1.bf16.msra.mxu0 0
    %1031 = vmatprep.subr.bf16.mxu0 0
    %1032 = vmatpush1.bf16.msra.mxu0 0
    %1033 = vmatprep.subr.bf16.mxu0 0
    %1034 = vmatpush1.bf16.msra.mxu0 0
    %1035 = vmatprep.subr.bf16.mxu0 0
    %1036 = vmatpush1.bf16.msra.mxu0 0
    %1037 = vmatprep.subr.bf16.mxu0 0
    %1038 = vmatpush1.bf16.msra.mxu0 0
    %1039 = vmatprep.subr.bf16.mxu0 0
    %1040 = vmatpush1.bf16.msra.mxu0 0
    %1041 = vmatprep.subr.bf16.mxu0 0
    %1042 = vmatpush1.bf16.msra.mxu0 0
    %1043 = vmatprep.subr.bf16.mxu0 0
    %1044 = vmatpush1.bf16.msra.mxu0 0
    %1045 = vmatprep.subr.bf16.mxu0 0
    %1046 = vmatpush1.bf16.msra.mxu0 0
    %1047 = vmatprep.subr.bf16.mxu0 0
    %1048 = vmatpush1.bf16.msra.mxu0 0
    %1049 = vmatprep.subr.bf16.mxu0 0
    %1050 = vmatpush1.bf16.msra.mxu0 0
    %1051 = vmatprep.mubr.bf16.mxu0 0
    %1052 = vmatmul.mubr.bf16.gmra.mrb[0].mxu0 %v1017
    %v1053 = vpop.f32.mrb[0].mxu0
    %v1054 = vadd.f32 0.0, %v1053
    %v1055 = vpop.f32.mrb[0].mxu0
    %v1056 = vpop.f32.mrb[0].mxu0
    %v1057 = vpop.f32.mrb[0].mxu0
    %1058 = vdwg.mxu0
    %v1059 = vadd.f32 %v1011, %v1054
    %v1060 = vxor.u32 %v1059, 2147483648
    %v1061 = vmul.f32 %v1060, 1.442695
    %v1062 = vpow.pop %v1061
    %v1063 = vadd.f32 %v1062, 1.0
    %v1064 = vrcp.pop %v1063
    %v1065 = vmul.f32 1.0, %v1064
    %v1066 = vtanh.pop %v1059
    %v1067 = vmul.f32 %v1065, %v999
    %1069 = vrot.lane.b32.xlu0 %v1066, 32
    %v1070 = vpop.permute.xlu0 %1069
    %v1072 = vmul.f32 %v1065, %v1070
    %1074 = vrot.lane.b32.xlu0 %v1072, 32
    %v1075 = vpop.permute.xlu0 %1074
    %v1077 = vadd.f32 %v1067, %v1075
    %v1078 = vtanh.pop %v1077
    %1080 = vrot.lane.b32.xlu0 %v1078, 32
    %v1081 = vpop.permute.xlu0 %1080
    %v1083 = vmul.f32 %v1065, %v1081
    %1085 = vrot.lane.b32.xlu0 %v1083, 64
    %v1086 = vpop.permute.xlu0 %1085
    %1088 = vst.msk [vmem:[#allocation3 + $0x2] sm:$0x3] %vm208, %v1086
    %v1089 = vld [vmem:[#allocation2 + $0x4] sm:$0x3]
    %v1090 = vpack.c.bf16 %v1083, %v1083
    %1092 = vrot.lane.b32.xlu0 %v1090, 64
    %v1093 = vpop.permute.xlu0 %1092
    %v1095 = vsel %vm135, %v1093, 0
    %1097 = vmatprep.subr.bf16.mxu0 0
    %1098 = vmatpush1.bf16.msra.mxu0 %v937
    %1099 = vmatprep.subr.bf16.mxu0 0
    %1100 = vmatpush1.bf16.msra.mxu0 %v938
    %1101 = vmatprep.subr.bf16.mxu0 0
    %1102 = vmatpush1.bf16.msra.mxu0 0
    %1103 = vmatprep.subr.bf16.mxu0 0
    %1104 = vmatpush1.bf16.msra.mxu0 0
    %1105 = vmatprep.subr.bf16.mxu0 0
    %1106 = vmatpush1.bf16.msra.mxu0 0
    %1107 = vmatprep.subr.bf16.mxu0 0
    %1108 = vmatpush1.bf16.msra.mxu0 0
    %1109 = vmatprep.subr.bf16.mxu0 0
    %1110 = vmatpush1.bf16.msra.mxu0 0
    %1111 = vmatprep.subr.bf16.mxu0 0
    %1112 = vmatpush1.bf16.msra.mxu0 0
    %1113 = vmatprep.subr.bf16.mxu0 0
    %1114 = vmatpush1.bf16.msra.mxu0 0
    %1115 = vmatprep.subr.bf16.mxu0 0
    %1116 = vmatpush1.bf16.msra.mxu0 0
    %1117 = vmatprep.subr.bf16.mxu0 0
    %1118 = vmatpush1.bf16.msra.mxu0 0
    %1119 = vmatprep.subr.bf16.mxu0 0
    %1120 = vmatpush1.bf16.msra.mxu0 0
    %1121 = vmatprep.subr.bf16.mxu0 0
    %1122 = vmatpush1.bf16.msra.mxu0 0
    %1123 = vmatprep.subr.bf16.mxu0 0
    %1124 = vmatpush1.bf16.msra.mxu0 0
    %1125 = vmatprep.subr.bf16.mxu0 0
    %1126 = vmatpush1.bf16.msra.mxu0 0
    %1127 = vmatprep.subr.bf16.mxu0 0
    %1128 = vmatpush1.bf16.msra.mxu0 0
    %1129 = vmatprep.mubr.bf16.mxu0 0
    %1130 = vmatmul.mubr.bf16.gmra.mrb[0].mxu0 %v1095
    %v1131 = vpop.f32.mrb[0].mxu0
    %v1132 = vadd.f32 0.0, %v1131
    %v1133 = vpop.f32.mrb[0].mxu0
    %v1134 = vpop.f32.mrb[0].mxu0
    %v1135 = vpop.f32.mrb[0].mxu0
    %1136 = vdwg.mxu0
    %v1137 = vadd.f32 %v1089, %v1132
    %v1138 = vxor.u32 %v1137, 2147483648
    %v1139 = vmul.f32 %v1138, 1.442695
    %v1140 = vpow.pop %v1139
    %v1141 = vadd.f32 %v1140, 1.0
    %v1142 = vrcp.pop %v1141
    %v1143 = vmul.f32 1.0, %v1142
    %v1144 = vtanh.pop %v1137
    %v1145 = vmul.f32 %v1143, %v1077
    %1147 = vrot.lane.b32.xlu0 %v1144, 32
    %v1148 = vpop.permute.xlu0 %1147
    %v1150 = vmul.f32 %v1143, %v1148
    %1152 = vrot.lane.b32.xlu0 %v1150, 32
    %v1153 = vpop.permute.xlu0 %1152
    %v1155 = vadd.f32 %v1145, %v1153
    %v1156 = vtanh.pop %v1155
    %1158 = vrot.lane.b32.xlu0 %v1156, 32
    %v1159 = vpop.permute.xlu0 %1158
    %v1161 = vmul.f32 %v1143, %v1159
    %1163 = vrot.lane.b32.xlu0 %v1161, 64
    %v1164 = vpop.permute.xlu0 %1163
    %1166 = vst.msk [vmem:[#allocation3 + $0x4] sm:$0x3] %vm208, %v1164
    %v1167 = vld [vmem:[#allocation2 + $0x6] sm:$0x3]
    %v1168 = vpack.c.bf16 %v1161, %v1161
    %1170 = vrot.lane.b32.xlu0 %v1168, 64
    %v1171 = vpop.permute.xlu0 %1170
    %v1173 = vsel %vm135, %v1171, 0
    %1175 = vmatprep.subr.bf16.mxu0 0
    %1176 = vmatpush1.bf16.msra.mxu0 %v937
    %1177 = vmatprep.subr.bf16.mxu0 0
    %1178 = vmatpush1.bf16.msra.mxu0 %v938
    %1179 = vmatprep.subr.bf16.mxu0 0
    %1180 = vmatpush1.bf16.msra.mxu0 0
    %1181 = vmatprep.subr.bf16.mxu0 0
    %1182 = vmatpush1.bf16.msra.mxu0 0
    %1183 = vmatprep.subr.bf16.mxu0 0
    %1184 = vmatpush1.bf16.msra.mxu0 0
    %1185 = vmatprep.subr.bf16.mxu0 0
    %1186 = vmatpush1.bf16.msra.mxu0 0
    %1187 = vmatprep.subr.bf16.mxu0 0
    %1188 = vmatpush1.bf16.msra.mxu0 0
    %1189 = vmatprep.subr.bf16.mxu0 0
    %1190 = vmatpush1.bf16.msra.mxu0 0
    %1191 = vmatprep.subr.bf16.mxu0 0
    %1192 = vmatpush1.bf16.msra.mxu0 0
    %1193 = vmatprep.subr.bf16.mxu0 0
    %1194 = vmatpush1.bf16.msra.mxu0 0
    %1195 = vmatprep.subr.bf16.mxu0 0
    %1196 = vmatpush1.bf16.msra.mxu0 0
    %1197 = vmatprep.subr.bf16.mxu0 0
    %1198 = vmatpush1.bf16.msra.mxu0 0
    %1199 = vmatprep.subr.bf16.mxu0 0
    %1200 = vmatpush1.bf16.msra.mxu0 0
    %1201 = vmatprep.subr.bf16.mxu0 0
    %1202 = vmatpush1.bf16.msra.mxu0 0
    %1203 = vmatprep.subr.bf16.mxu0 0
    %1204 = vmatpush1.bf16.msra.mxu0 0
    %1205 = vmatprep.subr.bf16.mxu0 0
    %1206 = vmatpush1.bf16.msra.mxu0 0
    %1207 = vmatprep.mubr.bf16.mxu0 0
    %1208 = vmatmul.mubr.bf16.gmra.mrb[0].mxu0 %v1173
    %v1209 = vpop.f32.mrb[0].mxu0
    %v1210 = vadd.f32 0.0, %v1209
    %v1211 = vpop.f32.mrb[0].mxu0
    %v1212 = vpop.f32.mrb[0].mxu0
    %v1213 = vpop.f32.mrb[0].mxu0
    %1214 = vdwg.mxu0
    %v1215 = vadd.f32 %v1167, %v1210
    %v1216 = vxor.u32 %v1215, 2147483648
    %v1217 = vmul.f32 %v1216, 1.442695
    %v1218 = vpow.pop %v1217
    %v1219 = vadd.f32 %v1218, 1.0
    %v1220 = vrcp.pop %v1219
    %v1221 = vmul.f32 1.0, %v1220
    %v1222 = vtanh.pop %v1215
    %v1223 = vmul.f32 %v1221, %v1155
    %1225 = vrot.lane.b32.xlu0 %v1222, 32
    %v1226 = vpop.permute.xlu0 %1225
    %v1228 = vmul.f32 %v1221, %v1226
    %1230 = vrot.lane.b32.xlu0 %v1228, 32
    %v1231 = vpop.permute.xlu0 %1230
    %v1233 = vadd.f32 %v1223, %v1231
    %v1234 = vtanh.pop %v1233
    %1236 = vrot.lane.b32.xlu0 %v1234, 32
    %v1237 = vpop.permute.xlu0 %1236
    %v1239 = vmul.f32 %v1221, %v1237
    %1241 = vrot.lane.b32.xlu0 %v1239, 64
    %v1242 = vpop.permute.xlu0 %1241
    %1244 = vst.msk [vmem:[#allocation3 + $0x6] sm:$0x3] %vm208, %v1242
    %v1245 = vld [vmem:[#allocation2 + $0x8] sm:$0x3]
    %v1246 = vpack.c.bf16 %v1239, %v1239
    %1248 = vrot.lane.b32.xlu0 %v1246, 64
    %v1249 = vpop.permute.xlu0 %1248
    %v1251 = vsel %vm135, %v1249, 0
    %1253 = vmatprep.subr.bf16.mxu0 0
    %1254 = vmatpush1.bf16.msra.mxu0 %v937
    %1255 = vmatprep.subr.bf16.mxu0 0
    %1256 = vmatpush1.bf16.msra.mxu0 %v938
    %1257 = vmatprep.subr.bf16.mxu0 0
    %1258 = vmatpush1.bf16.msra.mxu0 0
    %1259 = vmatprep.subr.bf16.mxu0 0
    %1260 = vmatpush1.bf16.msra.mxu0 0
    %1261 = vmatprep.subr.bf16.mxu0 0
    %1262 = vmatpush1.bf16.msra.mxu0 0
    %1263 = vmatprep.subr.bf16.mxu0 0
    %1264 = vmatpush1.bf16.msra.mxu0 0
    %1265 = vmatprep.subr.bf16.mxu0 0
    %1266 = vmatpush1.bf16.msra.mxu0 0
    %1267 = vmatprep.subr.bf16.mxu0 0
    %1268 = vmatpush1.bf16.msra.mxu0 0
    %1269 = vmatprep.subr.bf16.mxu0 0
    %1270 = vmatpush1.bf16.msra.mxu0 0
    %1271 = vmatprep.subr.bf16.mxu0 0
    %1272 = vmatpush1.bf16.msra.mxu0 0
    %1273 = vmatprep.subr.bf16.mxu0 0
    %1274 = vmatpush1.bf16.msra.mxu0 0
    %1275 = vmatprep.subr.bf16.mxu0 0
    %1276 = vmatpush1.bf16.msra.mxu0 0
    %1277 = vmatprep.subr.bf16.mxu0 0
    %1278 = vmatpush1.bf16.msra.mxu0 0
    %1279 = vmatprep.subr.bf16.mxu0 0
    %1280 = vmatpush1.bf16.msra.mxu0 0
    %1281 = vmatprep.subr.bf16.mxu0 0
    %1282 = vmatpush1.bf16.msra.mxu0 0
    %1283 = vmatprep.subr.bf16.mxu0 0
    %1284 = vmatpush1.bf16.msra.mxu0 0
    %1285 = vmatprep.mubr.bf16.mxu0 0
    %1286 = vmatmul.mubr.bf16.gmra.mrb[0].mxu0 %v1251
    %v1287 = vpop.f32.mrb[0].mxu0
    %v1288 = vadd.f32 0.0, %v1287
    %v1289 = vpop.f32.mrb[0].mxu0
    %v1290 = vpop.f32.mrb[0].mxu0
    %v1291 = vpop.f32.mrb[0].mxu0
    %1292 = vdwg.mxu0
    %v1293 = vadd.f32 %v1245, %v1288
    %v1294 = vxor.u32 %v1293, 2147483648
    %v1295 = vmul.f32 %v1294, 1.442695
    %v1296 = vpow.pop %v1295
    %v1297 = vadd.f32 %v1296, 1.0
    %v1298 = vrcp.pop %v1297
    %v1299 = vmul.f32 1.0, %v1298
    %v1300 = vtanh.pop %v1293
    %v1301 = vmul.f32 %v1299, %v1233
    %1303 = vrot.lane.b32.xlu0 %v1300, 32
    %v1304 = vpop.permute.xlu0 %1303
    %v1306 = vmul.f32 %v1299, %v1304
    %1308 = vrot.lane.b32.xlu0 %v1306, 32
    %v1309 = vpop.permute.xlu0 %1308
    %v1311 = vadd.f32 %v1301, %v1309
    %v1312 = vtanh.pop %v1311
    %1314 = vrot.lane.b32.xlu0 %v1312, 32
    %v1315 = vpop.permute.xlu0 %1314
    %v1317 = vmul.f32 %v1299, %v1315
    %1319 = vrot.lane.b32.xlu0 %v1317, 64
    %v1320 = vpop.permute.xlu0 %1319
    %1322 = vst.msk [vmem:[#allocation3 + $0x8] sm:$0x3] %vm208, %v1320
    %v1323 = vld [vmem:[#allocation2 + $0xa] sm:$0x3]
    %v1324 = vpack.c.bf16 %v1317, %v1317
    %1326 = vrot.lane.b32.xlu0 %v1324, 64
    %v1327 = vpop.permute.xlu0 %1326
    %v1329 = vsel %vm135, %v1327, 0
    %1331 = vmatprep.subr.bf16.mxu0 0
    %1332 = vmatpush1.bf16.msra.mxu0 %v937
    %1333 = vmatprep.subr.bf16.mxu0 0
    %1334 = vmatpush1.bf16.msra.mxu0 %v938
    %1335 = vmatprep.subr.bf16.mxu0 0
    %1336 = vmatpush1.bf16.msra.mxu0 0
    %1337 = vmatprep.subr.bf16.mxu0 0
    %1338 = vmatpush1.bf16.msra.mxu0 0
    %1339 = vmatprep.subr.bf16.mxu0 0
    %1340 = vmatpush1.bf16.msra.mxu0 0
    %1341 = vmatprep.subr.bf16.mxu0 0
    %1342 = vmatpush1.bf16.msra.mxu0 0
    %1343 = vmatprep.subr.bf16.mxu0 0
    %1344 = vmatpush1.bf16.msra.mxu0 0
    %1345 = vmatprep.subr.bf16.mxu0 0
    %1346 = vmatpush1.bf16.msra.mxu0 0
    %1347 = vmatprep.subr.bf16.mxu0 0
    %1348 = vmatpush1.bf16.msra.mxu0 0
    %1349 = vmatprep.subr.bf16.mxu0 0
    %1350 = vmatpush1.bf16.msra.mxu0 0
    %1351 = vmatprep.subr.bf16.mxu0 0
    %1352 = vmatpush1.bf16.msra.mxu0 0
    %1353 = vmatprep.subr.bf16.mxu0 0
    %1354 = vmatpush1.bf16.msra.mxu0 0
    %1355 = vmatprep.subr.bf16.mxu0 0
    %1356 = vmatpush1.bf16.msra.mxu0 0
    %1357 = vmatprep.subr.bf16.mxu0 0
    %1358 = vmatpush1.bf16.msra.mxu0 0
    %1359 = vmatprep.subr.bf16.mxu0 0
    %1360 = vmatpush1.bf16.msra.mxu0 0
    %1361 = vmatprep.subr.bf16.mxu0 0
    %1362 = vmatpush1.bf16.msra.mxu0 0
    %1363 = vmatprep.mubr.bf16.mxu0 0
    %1364 = vmatmul.mubr.bf16.gmra.mrb[0].mxu0 %v1329
    %v1365 = vpop.f32.mrb[0].mxu0
    %v1366 = vadd.f32 0.0, %v1365
    %v1367 = vpop.f32.mrb[0].mxu0
    %v1368 = vpop.f32.mrb[0].mxu0
    %v1369 = vpop.f32.mrb[0].mxu0
    %1370 = vdwg.mxu0
    %v1371 = vadd.f32 %v1323, %v1366
    %v1372 = vxor.u32 %v1371, 2147483648
    %v1373 = vmul.f32 %v1372, 1.442695
    %v1374 = vpow.pop %v1373
    %v1375 = vadd.f32 %v1374, 1.0
    %v1376 = vrcp.pop %v1375
    %v1377 = vmul.f32 1.0, %v1376
    %v1378 = vtanh.pop %v1371
    %v1379 = vmul.f32 %v1377, %v1311
    %1381 = vrot.lane.b32.xlu0 %v1378, 32
    %v1382 = vpop.permute.xlu0 %1381
    %v1384 = vmul.f32 %v1377, %v1382
    %1386 = vrot.lane.b32.xlu0 %v1384, 32
    %v1387 = vpop.permute.xlu0 %1386
    %v1389 = vadd.f32 %v1379, %v1387
    %v1390 = vtanh.pop %v1389
    %1392 = vrot.lane.b32.xlu0 %v1390, 32
    %v1393 = vpop.permute.xlu0 %1392
    %v1395 = vmul.f32 %v1377, %v1393
    %1397 = vrot.lane.b32.xlu0 %v1395, 64
    %v1398 = vpop.permute.xlu0 %1397
    %1400 = vst.msk [vmem:[#allocation3 + $0xa] sm:$0x3] %vm208, %v1398
    %v1401 = vld [vmem:[#allocation2 + $0xc] sm:$0x3]
    %v1402 = vpack.c.bf16 %v1395, %v1395
    %1404 = vrot.lane.b32.xlu0 %v1402, 64
    %v1405 = vpop.permute.xlu0 %1404
    %v1407 = vsel %vm135, %v1405, 0
    %1409 = vmatprep.subr.bf16.mxu0 0
    %1410 = vmatpush1.bf16.msra.mxu0 %v937
    %1411 = vmatprep.subr.bf16.mxu0 0
    %1412 = vmatpush1.bf16.msra.mxu0 %v938
    %1413 = vmatprep.subr.bf16.mxu0 0
    %1414 = vmatpush1.bf16.msra.mxu0 0
    %1415 = vmatprep.subr.bf16.mxu0 0
    %1416 = vmatpush1.bf16.msra.mxu0 0
    %1417 = vmatprep.subr.bf16.mxu0 0
    %1418 = vmatpush1.bf16.msra.mxu0 0
    %1419 = vmatprep.subr.bf16.mxu0 0
    %1420 = vmatpush1.bf16.msra.mxu0 0
    %1421 = vmatprep.subr.bf16.mxu0 0
    %1422 = vmatpush1.bf16.msra.mxu0 0
    %1423 = vmatprep.subr.bf16.mxu0 0
    %1424 = vmatpush1.bf16.msra.mxu0 0
    %1425 = vmatprep.subr.bf16.mxu0 0
    %1426 = vmatpush1.bf16.msra.mxu0 0
    %1427 = vmatprep.subr.bf16.mxu0 0
    %1428 = vmatpush1.bf16.msra.mxu0 0
    %1429 = vmatprep.subr.bf16.mxu0 0
    %1430 = vmatpush1.bf16.msra.mxu0 0
    %1431 = vmatprep.subr.bf16.mxu0 0
    %1432 = vmatpush1.bf16.msra.mxu0 0
    %1433 = vmatprep.subr.bf16.mxu0 0
    %1434 = vmatpush1.bf16.msra.mxu0 0
    %1435 = vmatprep.subr.bf16.mxu0 0
    %1436 = vmatpush1.bf16.msra.mxu0 0
    %1437 = vmatprep.subr.bf16.mxu0 0
    %1438 = vmatpush1.bf16.msra.mxu0 0
    %1439 = vmatprep.subr.bf16.mxu0 0
    %1440 = vmatpush1.bf16.msra.mxu0 0
    %1441 = vmatprep.mubr.bf16.mxu0 0
    %1442 = vmatmul.mubr.bf16.gmra.mrb[0].mxu0 %v1407
    %v1443 = vpop.f32.mrb[0].mxu0
    %v1444 = vadd.f32 0.0, %v1443
    %v1445 = vpop.f32.mrb[0].mxu0
    %v1446 = vpop.f32.mrb[0].mxu0
    %v1447 = vpop.f32.mrb[0].mxu0
    %1448 = vdwg.mxu0
    %v1449 = vadd.f32 %v1401, %v1444
    %v1450 = vxor.u32 %v1449, 2147483648
    %v1451 = vmul.f32 %v1450, 1.442695
    %v1452 = vpow.pop %v1451
    %v1453 = vadd.f32 %v1452, 1.0
    %v1454 = vrcp.pop %v1453
    %v1455 = vmul.f32 1.0, %v1454
    %v1456 = vtanh.pop %v1449
    %v1457 = vmul.f32 %v1455, %v1389
    %1459 = vrot.lane.b32.xlu0 %v1456, 32
    %v1460 = vpop.permute.xlu0 %1459
    %v1462 = vmul.f32 %v1455, %v1460
    %1464 = vrot.lane.b32.xlu0 %v1462, 32
    %v1465 = vpop.permute.xlu0 %1464
    %v1467 = vadd.f32 %v1457, %v1465
    %v1468 = vtanh.pop %v1467
    %1470 = vrot.lane.b32.xlu0 %v1468, 32
    %v1471 = vpop.permute.xlu0 %1470
    %v1473 = vmul.f32 %v1455, %v1471
    %1475 = vrot.lane.b32.xlu0 %v1473, 64
    %v1476 = vpop.permute.xlu0 %1475
    %1478 = vst.msk [vmem:[#allocation3 + $0xc] sm:$0x3] %vm208, %v1476
    %v1479 = vld [vmem:[#allocation2 + $0xe] sm:$0x3]
    %v1480 = vpack.c.bf16 %v1473, %v1473
    %1482 = vrot.lane.b32.xlu0 %v1480, 64
    %v1483 = vpop.permute.xlu0 %1482
    %v1485 = vsel %vm135, %v1483, 0
    %1487 = vmatprep.subr.bf16.mxu0 0
    %1488 = vmatpush1.bf16.msra.mxu0 %v937
    %1489 = vmatprep.subr.bf16.mxu0 0
    %1490 = vmatpush1.bf16.msra.mxu0 %v938
    %1491 = vmatprep.subr.bf16.mxu0 0
    %1492 = vmatpush1.bf16.msra.mxu0 0
    %1493 = vmatprep.subr.bf16.mxu0 0
    %1494 = vmatpush1.bf16.msra.mxu0 0
    %1495 = vmatprep.subr.bf16.mxu0 0
    %1496 = vmatpush1.bf16.msra.mxu0 0
    %1497 = vmatprep.subr.bf16.mxu0 0
    %1498 = vmatpush1.bf16.msra.mxu0 0
    %1499 = vmatprep.subr.bf16.mxu0 0
    %1500 = vmatpush1.bf16.msra.mxu0 0
    %1501 = vmatprep.subr.bf16.mxu0 0
    %1502 = vmatpush1.bf16.msra.mxu0 0
    %1503 = vmatprep.subr.bf16.mxu0 0
    %1504 = vmatpush1.bf16.msra.mxu0 0
    %1505 = vmatprep.subr.bf16.mxu0 0
    %1506 = vmatpush1.bf16.msra.mxu0 0
    %1507 = vmatprep.subr.bf16.mxu0 0
    %1508 = vmatpush1.bf16.msra.mxu0 0
    %1509 = vmatprep.subr.bf16.mxu0 0
    %1510 = vmatpush1.bf16.msra.mxu0 0
    %1511 = vmatprep.subr.bf16.mxu0 0
    %1512 = vmatpush1.bf16.msra.mxu0 0
    %1513 = vmatprep.subr.bf16.mxu0 0
    %1514 = vmatpush1.bf16.msra.mxu0 0
    %1515 = vmatprep.subr.bf16.mxu0 0
    %1516 = vmatpush1.bf16.msra.mxu0 0
    %1517 = vmatprep.subr.bf16.mxu0 0
    %1518 = vmatpush1.bf16.msra.mxu0 0
    %1519 = vmatprep.mubr.bf16.mxu0 0
    %1520 = vmatmul.mubr.bf16.gmra.mrb[0].mxu0 %v1485
    %v1521 = vpop.f32.mrb[0].mxu0
    %v1522 = vadd.f32 0.0, %v1521
    %v1523 = vpop.f32.mrb[0].mxu0
    %v1524 = vpop.f32.mrb[0].mxu0
    %v1525 = vpop.f32.mrb[0].mxu0
    %1526 = vdwg.mxu0
    %v1527 = vadd.f32 %v1479, %v1522
    %v1528 = vxor.u32 %v1527, 2147483648
    %v1529 = vmul.f32 %v1528, 1.442695
    %v1530 = vpow.pop %v1529
    %v1531 = vadd.f32 %v1530, 1.0
    %v1532 = vrcp.pop %v1531
    %v1533 = vmul.f32 1.0, %v1532
    %v1534 = vtanh.pop %v1527
    %v1535 = vmul.f32 %v1533, %v1467
    %1537 = vrot.lane.b32.xlu0 %v1534, 32
    %v1538 = vpop.permute.xlu0 %1537
    %v1540 = vmul.f32 %v1533, %v1538
    %1542 = vrot.lane.b32.xlu0 %v1540, 32
    %v1543 = vpop.permute.xlu0 %1542
    %v1545 = vadd.f32 %v1535, %v1543
    %v1546 = vtanh.pop %v1545
    %1548 = vrot.lane.b32.xlu0 %v1546, 32
    %v1549 = vpop.permute.xlu0 %1548
    %v1551 = vmul.f32 %v1533, %v1549
    %1553 = vrot.lane.b32.xlu0 %v1551, 64
    %v1554 = vpop.permute.xlu0 %1553
    %1556 = vst.msk [vmem:[#allocation3 + $0xe] sm:$0x3] %vm208, %v1554
    %v1557 = vld [vmem:[#allocation3] ss:$2 sm:$0xff]
    %s1558 = scalar_lea.vmem [#allocation3], 1
    %v1559 = vld [vmem:[%s1558] ss:$2 sm:$0xff]
    %v1560 = vpack.c.bf16 %v1559, %v1557
    %s1561 = scalar_lea.vmem [#allocation8], 64
    %v1562 = vld [vmem:[%s1561] sm:$0xf]
    %v1563 = vld [vmem:[%s1561 + $0x4] sm:$0xf]
    %v1564 = vld [vmem:[%s1561 + $0x8] sm:$0xf]
    %v1565 = vld [vmem:[%s1561 + $0xc] sm:$0xf]
    %v1570 = vunpack.c.l.b16 %v1562
    %v1571 = vunpack.c.l.b16 %v1563
    %v1572 = vunpack.c.l.b16 %v1564
    %v1573 = vunpack.c.l.b16 %v1565
    %v1574 = vpack.c.b16 %v1571, %v1570
    %v1575 = vpack.c.b16 %v1573, %v1572
    %v1579 = vsel %vm135, %v1560, 0
    %1581 = vmatprep.subr.bf16.mxu0 0
    %1582 = vmatpush1.bf16.msra.mxu0 %v1574
    %1583 = vmatprep.subr.bf16.mxu0 0
    %1584 = vmatpush1.bf16.msra.mxu0 %v1575
    %1585 = vmatprep.subr.bf16.mxu0 0
    %1586 = vmatpush1.bf16.msra.mxu0 0
    %1587 = vmatprep.subr.bf16.mxu0 0
    %1588 = vmatpush1.bf16.msra.mxu0 0
    %1589 = vmatprep.subr.bf16.mxu0 0
    %1590 = vmatpush1.bf16.msra.mxu0 0
    %1591 = vmatprep.subr.bf16.mxu0 0
    %1592 = vmatpush1.bf16.msra.mxu0 0
    %1593 = vmatprep.subr.bf16.mxu0 0
    %1594 = vmatpush1.bf16.msra.mxu0 0
    %1595 = vmatprep.subr.bf16.mxu0 0
    %1596 = vmatpush1.bf16.msra.mxu0 0
    %1597 = vmatprep.subr.bf16.mxu0 0
    %1598 = vmatpush1.bf16.msra.mxu0 0
    %1599 = vmatprep.subr.bf16.mxu0 0
    %1600 = vmatpush1.bf16.msra.mxu0 0
    %1601 = vmatprep.subr.bf16.mxu0 0
    %1602 = vmatpush1.bf16.msra.mxu0 0
    %1603 = vmatprep.subr.bf16.mxu0 0
    %1604 = vmatpush1.bf16.msra.mxu0 0
    %1605 = vmatprep.subr.bf16.mxu0 0
    %1606 = vmatpush1.bf16.msra.mxu0 0
    %1607 = vmatprep.subr.bf16.mxu0 0
    %1608 = vmatpush1.bf16.msra.mxu0 0
    %1609 = vmatprep.subr.bf16.mxu0 0
    %1610 = vmatpush1.bf16.msra.mxu0 0
    %1611 = vmatprep.subr.bf16.mxu0 0
    %1612 = vmatpush1.bf16.msra.mxu0 0
    %1613 = vmatprep.mubr.bf16.mxu0 0
    %1614 = vmatmul.mubr.bf16.gmra.mrb[0].mxu0 %v1579
    %v1615 = vpop.f32.mrb[0].mxu0
    %v1616 = vadd.f32 0.0, %v1615
    %v1617 = vpop.f32.mrb[0].mxu0
    %v1618 = vpop.f32.mrb[0].mxu0
    %v1619 = vadd.f32 0.0, %v1618
    %v1620 = vpop.f32.mrb[0].mxu0
    %1621 = vdwg.mxu0
    %v1622 = vld [vmem:[#allocation7 + $0x12] sm:$0x1]
    %v1623 = vlaneseq
    %v1624 = vshrl.u32 %v1623, 7
    %v1625 = vsub.s32 0, %v1624
    %v1626 = vrot.slane %v1622, %v1625
    %v1627 = vadd.f32 %v1616, %v1626
    %v1628 = vadd.f32 %v1619, %v1626
    %v1629 = vpack.c.bf16 %v1628, %v1627
    %s1630 = scalar_lea.vmem [#allocation8], 80
    %v1631 = vld [vmem:[%s1630] sm:$0xf]
    %v1632 = vld [vmem:[%s1630 + $0x4] sm:$0xf]
    %v1633 = vld [vmem:[%s1630 + $0x8] sm:$0xf]
    %v1634 = vld [vmem:[%s1630 + $0xc] sm:$0xf]
    %v1635 = vld [vmem:[#allocation7 + $0x13] sm:$0x1]
    %v1636 = vlaneseq
    %v1637 = vshrl.u32 %v1636, 7
    %v1638 = vsub.s32 0, %v1637
    %v1639 = vrot.slane %v1635, %v1638
    %v1644 = vunpack.c.l.b16 %v1631
    %v1645 = vunpack.c.l.b16 %v1632
    %v1646 = vunpack.c.l.b16 %v1633
    %v1647 = vunpack.c.l.b16 %v1634
    %v1648 = vpack.c.b16 %v1645, %v1644
    %v1649 = vpack.c.b16 %v1647, %v1646
    %v1653 = vsel %vm135, %v1629, 0
    %1655 = vmatprep.subr.bf16.mxu0 0
    %1656 = vmatpush1.bf16.msra.mxu0 %v1648
    %1657 = vmatprep.subr.bf16.mxu0 0
    %1658 = vmatpush1.bf16.msra.mxu0 %v1649
    %1659 = vmatprep.subr.bf16.mxu0 0
    %1660 = vmatpush1.bf16.msra.mxu0 0
    %1661 = vmatprep.subr.bf16.mxu0 0
    %1662 = vmatpush1.bf16.msra.mxu0 0
    %1663 = vmatprep.subr.bf16.mxu0 0
    %1664 = vmatpush1.bf16.msra.mxu0 0
    %1665 = vmatprep.subr.bf16.mxu0 0
    %1666 = vmatpush1.bf16.msra.mxu0 0
    %1667 = vmatprep.subr.bf16.mxu0 0
    %1668 = vmatpush1.bf16.msra.mxu0 0
    %1669 = vmatprep.subr.bf16.mxu0 0
    %1670 = vmatpush1.bf16.msra.mxu0 0
    %1671 = vmatprep.subr.bf16.mxu0 0
    %1672 = vmatpush1.bf16.msra.mxu0 0
    %1673 = vmatprep.subr.bf16.mxu0 0
    %1674 = vmatpush1.bf16.msra.mxu0 0
    %1675 = vmatprep.subr.bf16.mxu0 0
    %1676 = vmatpush1.bf16.msra.mxu0 0
    %1677 = vmatprep.subr.bf16.mxu0 0
    %1678 = vmatpush1.bf16.msra.mxu0 0
    %1679 = vmatprep.subr.bf16.mxu0 0
    %1680 = vmatpush1.bf16.msra.mxu0 0
    %1681 = vmatprep.subr.bf16.mxu0 0
    %1682 = vmatpush1.bf16.msra.mxu0 0
    %1683 = vmatprep.subr.bf16.mxu0 0
    %1684 = vmatpush1.bf16.msra.mxu0 0
    %1685 = vmatprep.subr.bf16.mxu0 0
    %1686 = vmatpush1.bf16.msra.mxu0 0
    %1687 = vmatprep.mubr.bf16.mxu0 0
    %1688 = vmatmul.mubr.bf16.gmra.mrb[0].mxu0 %v1653
    %v1689 = vpop.f32.mrb[0].mxu0
    %v1690 = vadd.f32 %v1639, %v1689
    %v1691 = vpop.f32.mrb[0].mxu0
    %v1692 = vpop.f32.mrb[0].mxu0
    %v1693 = vadd.f32 %v1639, %v1692
    %v1694 = vpop.f32.mrb[0].mxu0
    %1695 = vdwg.mxu0
    %1696 = vst [vmem:[%s3] sm:$0xff] %v1690
    %1697 = vst [vmem:[%s3 + $0x8] sm:$0xff] %v1693
    // Predicated region
    $region26: #{forward.1} parent=1 // pred_check
      _
    $region27: #{forward.1} parent=1 // pred_check_branch
      %1699 = sbr.rel (0) target = $region29
    $region28: #{forward.1} parent=1 // pred_region
      _
    $region29: #{forward.1} parent=1 // pred_fallthru
      _
    // Predicated region
    $region30: #{forward.1} parent=1 // pred_check
      _
    $region31: #{forward.1} parent=1 // pred_check_branch
      %1701 = sbr.rel (0) target = $region33
    $region32: #{forward.1} parent=1 // pred_region
      _
    $region33: #{forward.1} parent=1 // pred_fallthru
      _
    %1702 = vsyncpa [#allocation5], 1
    %1703 = vsyncpa [#allocation9], 1
    %1704 = vsyncpa [#allocation6], 1

</llo_original>
